<compile_context>
chip_gen: v6e
topology: v6e:2x2x1
jax: 0.10.0
libtpu: 0.0.40
codegen_flags: <defaults>
</compile_context>

<pallas_src>
import functools
import math

import jax
import jax.numpy as jnp
from jax.experimental import pallas as pl
from jax.experimental.pallas import tpu as pltpu

LN_EPS = 1e-5


def _layer_norm_f32(y):
    mean = jnp.mean(y, axis=-1, keepdims=True)
    c = y - mean
    var = jnp.mean(c * c, axis=-1, keepdims=True)
    return c * jax.lax.rsqrt(var + LN_EPS)


# --------------- fused multi-head attention + residual + LayerNorm -----------------

def _mha_ln_kernel(xq_ref, xkv_ref, wq_ref, wk_ref, wv_ref, wo_ref, o_ref, *,
                   n_heads, scale):
    # xq_ref : (1, Lq, d_model) tile (one batch element)
    # xkv_ref: (1, Lk, d_model) tile
    # wq_ref/wk_ref: (H, d_model, d_k); wv_ref: (H, d_model, d_v); wo_ref: (H, d_v, d_model)
    xq = xq_ref[0]
    xkv = xkv_ref[0]
    residual = xq.astype(jnp.float32)

    acc = jnp.zeros(residual.shape, jnp.float32)
    for h in range(n_heads):  # static unroll over heads; no lane slicing needed
        q = jnp.dot(xq, wq_ref[h], preferred_element_type=jnp.float32)    # (Lq, d_k)
        k = jnp.dot(xkv, wk_ref[h], preferred_element_type=jnp.float32)   # (Lk, d_k)
        v = jnp.dot(xkv, wv_ref[h], preferred_element_type=jnp.float32)   # (Lk, d_v)
        # scores = q @ k.T / sqrt(d_k)
        s = jax.lax.dot_general(q, k, (((1,), (1,)), ((), ())),
                                preferred_element_type=jnp.float32) * scale
        s = s - jnp.max(s, axis=-1, keepdims=True)
        p = jnp.exp(s)
        attn = p / jnp.sum(p, axis=-1, keepdims=True)
        ctx = jnp.dot(attn, v, preferred_element_type=jnp.float32)        # (Lq, d_v)
        acc = acc + jnp.dot(ctx, wo_ref[h], preferred_element_type=jnp.float32)

    o_ref[0] = _layer_norm_f32(acc + residual).astype(o_ref.dtype)


def mha_ln(xq, xkv, wq, wk, wv, wo, *, n_heads, d_k, d_v):
    """xq: [B, Lq, d_model], xkv: [B, Lk, d_model]; weights as in nn.Linear (in, out)."""
    B, Lq, d_model = xq.shape
    Lk = xkv.shape[1]

    # Per-head weight layout so the kernel reads whole (d_model, d_k) slabs.
    wq_h = wq.reshape(d_model, n_heads, d_k).transpose(1, 0, 2)
    wk_h = wk.reshape(d_model, n_heads, d_k).transpose(1, 0, 2)
    wv_h = wv.reshape(d_model, n_heads, d_v).transpose(1, 0, 2)
    wo_h = wo.reshape(n_heads, d_v, d_model)

    itemsize = xq.dtype.itemsize
    w_bytes = sum(int(w.size) * w.dtype.itemsize for w in (wq_h, wk_h, wv_h, wo_h))
    io_bytes = 2 * (2 * Lq * d_model + Lk * d_model) * itemsize
    vmem_limit = int(min(64 << 20, max(16 << 20, w_bytes + io_bytes + (8 << 20))))

    kernel = functools.partial(_mha_ln_kernel, n_heads=n_heads,
                               scale=1.0 / math.sqrt(d_k))

    def wspec():
        # Whole weight resident in VMEM, single-buffered (no per-step double buffering).
        return pl.BlockSpec(memory_space=pltpu.MemorySpace.VMEM)

    return pl.pallas_call(
        kernel,
        out_shape=jax.ShapeDtypeStruct((B, Lq, d_model), xq.dtype),
        grid_spec=pltpu.PrefetchScalarGridSpec(
            num_scalar_prefetch=0,
            grid=(B,),
            in_specs=[
                pl.BlockSpec((1, Lq, d_model), lambda b: (b, 0, 0)),
                pl.BlockSpec((1, Lk, d_model), lambda b: (b, 0, 0)),
                wspec(), wspec(), wspec(), wspec(),
            ],
            out_specs=pl.BlockSpec((1, Lq, d_model), lambda b: (b, 0, 0)),
        ),
        compiler_params=pltpu.CompilerParams(
            dimension_semantics=("parallel",),
            vmem_limit_bytes=vmem_limit),
    )(xq, xkv, wq_h, wk_h, wv_h, wo_h)


# --------------- position-wise FFN + residual + LayerNorm ---------------------------

def _ffn_ln_kernel(x_ref, w1_ref, w2_ref, o_ref):
    x = x_ref[...]                                    # (tm, d_model), native dtype
    h = jnp.maximum(
        jnp.dot(x, w1_ref[...], preferred_element_type=jnp.float32), 0.0)
    y = jnp.dot(h.astype(x.dtype), w2_ref[...], preferred_element_type=jnp.float32)
    y = y + x.astype(jnp.float32)                     # residual in f32
    o_ref[...] = _layer_norm_f32(y).astype(o_ref.dtype)


def poswise_ffn(x, w1, w2, *, tm=256):
    """x: [B, S, d_model], w1: [d_model, d_ff], w2: [d_ff, d_model]."""
    B, S, d_model = x.shape
    d_ff = w1.shape[1]
    M = B * S
    x2 = x.reshape(M, d_model)

    # Row tile: default 256, rounded to a multiple of 8, shrunk for tiny inputs;
    # pad the row count so no divisibility assert is needed.
    tm = max(8, ((tm + 7) // 8) * 8)
    m8 = ((M + 7) // 8) * 8
    tm_eff = min(tm, m8)
    m_pad = ((M + tm_eff - 1) // tm_eff) * tm_eff
    if m_pad != M:
        x2 = jnp.pad(x2, ((0, m_pad - M), (0, 0)))   # padded rows produce 0 (safe with eps)
    grid_m = m_pad // tm_eff

    itemsize = x.dtype.itemsize
    w_bytes = int(w1.size) * w1.dtype.itemsize + int(w2.size) * w2.dtype.itemsize
    io_bytes = 2 * 2 * tm_eff * d_model * itemsize          # double-buffered x / out tiles
    tmp_bytes = tm_eff * (d_ff + d_model) * 4                # f32 intermediates
    vmem_limit = int(min(64 << 20,
                         max(16 << 20, w_bytes + io_bytes + tmp_bytes + (8 << 20))))

    out2 = pl.pallas_call(
        _ffn_ln_kernel,
        out_shape=jax.ShapeDtypeStruct((m_pad, d_model), x.dtype),
        grid_spec=pltpu.PrefetchScalarGridSpec(
            num_scalar_prefetch=0,
            grid=(grid_m,),
            in_specs=[
                pl.BlockSpec((tm_eff, d_model), lambda i: (i, 0)),
                pl.BlockSpec(memory_space=pltpu.MemorySpace.VMEM),  # W1 resident, 1 buffer
                pl.BlockSpec(memory_space=pltpu.MemorySpace.VMEM),  # W2 resident, 1 buffer
            ],
            out_specs=pl.BlockSpec((tm_eff, d_model), lambda i: (i, 0)),
        ),
        compiler_params=pltpu.CompilerParams(
            dimension_semantics=("parallel",),
            vmem_limit_bytes=vmem_limit),
    )(x2, w1, w2)

    return out2[:M].reshape(B, S, d_model)


# --------------- full Transformer2_3_1 forward --------------------------------------

def transformer_forward(params, enc_inputs, dec_inputs, *, n_heads, d_k, d_v):
    x = enc_inputs
    for lyr in params["encoder"]:
        x = mha_ln(x, x, lyr["wq"], lyr["wk"], lyr["wv"], lyr["wo"],
                   n_heads=n_heads, d_k=d_k, d_v=d_v)
        x = poswise_ffn(x, lyr["w1"], lyr["w2"])
    y = dec_inputs
    for lyr in params["decoder"]:
        y = mha_ln(y, x, lyr["wq"], lyr["wk"], lyr["wv"], lyr["wo"],
                   n_heads=n_heads, d_k=d_k, d_v=d_v)
        y = poswise_ffn(y, lyr["w1"], lyr["w2"])
    return y


# --------------- pure-JAX reference --------------------------------------------------

def _mha_ln_ref(xq, xkv, wq, wk, wv, wo, n_heads, d_k, d_v):
    B, Lq, d_model = xq.shape
    Lk = xkv.shape[1]
    scale = 1.0 / math.sqrt(d_k)
    Q = (xq @ wq).reshape(B, Lq, n_heads, d_k).transpose(0, 2, 1, 3)
    K = (xkv @ wk).reshape(B, Lk, n_heads, d_k).transpose(0, 2, 1, 3)
    V = (xkv @ wv).reshape(B, Lk, n_heads, d_v).transpose(0, 2, 1, 3)
    s = jnp.einsum("bhqd,bhkd->bhqk", Q, K) * scale
    attn = jax.nn.softmax(s, axis=-1)
    ctx = jnp.einsum("bhqk,bhkd->bhqd", attn, V)
    ctx = ctx.transpose(0, 2, 1, 3).reshape(B, Lq, n_heads * d_v)
    return _layer_norm_f32(ctx @ wo + xq)


def _ffn_ln_ref(x, w1, w2):
    h = jnp.maximum(x @ w1, 0.0)
    return _layer_norm_f32(h @ w2 + x)


def _transformer_ref(params, enc_inputs, dec_inputs, n_heads, d_k, d_v):
    x = enc_inputs
    for lyr in params["encoder"]:
        x = _mha_ln_ref(x, x, lyr["wq"], lyr["wk"], lyr["wv"], lyr["wo"], n_heads, d_k, d_v)
        x = _ffn_ln_ref(x, lyr["w1"], lyr["w2"])
    y = dec_inputs
    for lyr in params["decoder"]:
        y = _mha_ln_ref(y, x, lyr["wq"], lyr["wk"], lyr["wv"], lyr["wo"], n_heads, d_k, d_v)
        y = _ffn_ln_ref(y, lyr["w1"], lyr["w2"])
    return y


# --------------- test ----------------------------------------------------------------

def _init_layer(key, d_model, d_ff, d_k, d_v, n_heads):
    ks = jax.random.split(key, 6)

    def u(k, shape, fan_in):
        return jax.random.uniform(k, shape, jnp.float32,
                                  minval=-1.0, maxval=1.0) / jnp.sqrt(fan_in)

    return dict(
        wq=u(ks[0], (d_model, n_heads * d_k), d_model),
        wk=u(ks[1], (d_model, n_heads * d_k), d_model),
        wv=u(ks[2], (d_model, n_heads * d_v), d_model),
        wo=u(ks[3], (n_heads * d_v, d_model), n_heads * d_v),
        w1=u(ks[4], (d_model, d_ff), d_model),
        w2=u(ks[5], (d_ff, d_model), d_ff),
    )


if __name__ == "__main__":
    # Small shapes consistent with the module: [batch, seq_len, d_model]
    d_model, d_ff, d_k, d_v, n_heads = 32, 64, 8, 8, 4
    n_enc_layers = 2
    batch, src_len, tgt_len = 2, 8, 8

    root = jax.random.PRNGKey(0)
    k_enc, k_dec, k_par = jax.random.split(root, 3)
    enc_inputs = jax.random.normal(k_enc, (batch, src_len, d_model), jnp.float32)
    dec_inputs = jax.random.normal(k_dec, (batch, tgt_len, d_model), jnp.float32)

    layer_keys = jax.random.split(k_par, n_enc_layers + 1)
    params = dict(
        encoder=[_init_layer(layer_keys[i], d_model, d_ff, d_k, d_v, n_heads)
                 for i in range(n_enc_layers)],
        decoder=[_init_layer(layer_keys[-1], d_model, d_ff, d_k, d_v, n_heads)],
    )

    out = transformer_forward(params, enc_inputs, dec_inputs,
                              n_heads=n_heads, d_k=d_k, d_v=d_v)
    out = jax.block_until_ready(out)

    ref = _transformer_ref(params, enc_inputs, dec_inputs, n_heads, d_k, d_v)
    assert out.shape == (batch, tgt_len, d_model)
    assert jnp.allclose(out, ref, atol=5e-4, rtol=5e-4), "mismatch vs reference"

    print("KERNEL_OK")
</pallas_src>

<mosaic_0001>
module attributes {stable_mosaic.version = 11 : i64} {
  func.func @_mha_ln_kernel(%arg0: i32, %arg1: memref<1x8x32xf32, #tpu.memory_space<vmem>>, %arg2: memref<1x8x32xf32, #tpu.memory_space<vmem>>, %arg3: memref<4x32x8xf32, #tpu.memory_space<vmem>>, %arg4: memref<4x32x8xf32, #tpu.memory_space<vmem>>, %arg5: memref<4x32x8xf32, #tpu.memory_space<vmem>>, %arg6: memref<4x8x32xf32, #tpu.memory_space<vmem>>, %arg7: memref<1x8x32xf32, #tpu.memory_space<vmem>>) attributes {dimension_semantics = [#tpu.dimension_semantics<parallel>], iteration_bounds = array<i64: 2>, scalar_prefetch = 0 : i64, scratch_operands = 0 : i64, tpu.core_type = #tpu.core_type<tc>, window_params = [{transform_indices = @transform_0, window_bounds = array<i64: 1, 8, 32>}, {transform_indices = @transform_1, window_bounds = array<i64: 1, 8, 32>}, {pipeline_mode = #tpu.pipeline_mode<synchronous>, transform_indices = @transform_2, window_bounds = array<i64: 4, 32, 8>}, {pipeline_mode = #tpu.pipeline_mode<synchronous>, transform_indices = @transform_3, window_bounds = array<i64: 4, 32, 8>}, {pipeline_mode = #tpu.pipeline_mode<synchronous>, transform_indices = @transform_4, window_bounds = array<i64: 4, 32, 8>}, {pipeline_mode = #tpu.pipeline_mode<synchronous>, transform_indices = @transform_5, window_bounds = array<i64: 4, 8, 32>}, {transform_indices = @transform_6, window_bounds = array<i64: 1, 8, 32>}]} {
    %c0 = arith.constant 0 : index
    %c0_0 = arith.constant 0 : index
    %c0_1 = arith.constant 0 : index
    %0 = vector.load %arg1[%c0, %c0_0, %c0_1] : memref<1x8x32xf32, #tpu.memory_space<vmem>>, vector<1x8x32xf32>
    %1 = vector.shape_cast %0 : vector<1x8x32xf32> to vector<8x32xf32>
    %c0_2 = arith.constant 0 : index
    %c0_3 = arith.constant 0 : index
    %c0_4 = arith.constant 0 : index
    %2 = vector.load %arg2[%c0_2, %c0_3, %c0_4] : memref<1x8x32xf32, #tpu.memory_space<vmem>>, vector<1x8x32xf32>
    %3 = vector.shape_cast %2 : vector<1x8x32xf32> to vector<8x32xf32>
    %cst = arith.constant 0.000000e+00 : f32
    %4 = vector.broadcast %cst : f32 to vector<8x32xf32>
    %c0_5 = arith.constant 0 : index
    %c0_6 = arith.constant 0 : index
    %c0_7 = arith.constant 0 : index
    %5 = vector.load %arg3[%c0_5, %c0_6, %c0_7] : memref<4x32x8xf32, #tpu.memory_space<vmem>>, vector<1x32x8xf32>
    %6 = vector.shape_cast %5 : vector<1x32x8xf32> to vector<32x8xf32>
    %cst_8 = arith.constant dense<0.000000e+00> : vector<8x8xf32>
    %7 = tpu.matmul %1, %6, %cst_8 {dimension_numbers = #tpu.dot_dimension_numbers<[1], [0], [0], [1], [0, 0, 1, 1], [], []>} : vector<8x32xf32>, vector<32x8xf32>, vector<8x8xf32> -> vector<8x8xf32>
    %c0_9 = arith.constant 0 : index
    %c0_10 = arith.constant 0 : index
    %c0_11 = arith.constant 0 : index
    %8 = vector.load %arg4[%c0_9, %c0_10, %c0_11] : memref<4x32x8xf32, #tpu.memory_space<vmem>>, vector<1x32x8xf32>
    %9 = vector.shape_cast %8 : vector<1x32x8xf32> to vector<32x8xf32>
    %cst_12 = arith.constant dense<0.000000e+00> : vector<8x8xf32>
    %10 = tpu.matmul %3, %9, %cst_12 {dimension_numbers = #tpu.dot_dimension_numbers<[1], [0], [0], [1], [0, 0, 1, 1], [], []>} : vector<8x32xf32>, vector<32x8xf32>, vector<8x8xf32> -> vector<8x8xf32>
    %c0_13 = arith.constant 0 : index
    %c0_14 = arith.constant 0 : index
    %c0_15 = arith.constant 0 : index
    %11 = vector.load %arg5[%c0_13, %c0_14, %c0_15] : memref<4x32x8xf32, #tpu.memory_space<vmem>>, vector<1x32x8xf32>
    %12 = vector.shape_cast %11 : vector<1x32x8xf32> to vector<32x8xf32>
    %cst_16 = arith.constant dense<0.000000e+00> : vector<8x8xf32>
    %13 = tpu.matmul %3, %12, %cst_16 {dimension_numbers = #tpu.dot_dimension_numbers<[1], [0], [0], [1], [0, 0, 1, 1], [], []>} : vector<8x32xf32>, vector<32x8xf32>, vector<8x8xf32> -> vector<8x8xf32>
    %cst_17 = arith.constant dense<0.000000e+00> : vector<8x8xf32>
    %14 = tpu.matmul %7, %10, %cst_17 {dimension_numbers = #tpu.dot_dimension_numbers<[1], [1], [0], [0], [0, 0, 1, 0], [], []>} : vector<8x8xf32>, vector<8x8xf32>, vector<8x8xf32> -> vector<8x8xf32>
    %cst_18 = arith.constant 0.353553385 : f32
    %15 = vector.broadcast %cst_18 : f32 to vector<8x8xf32>
    %16 = arith.mulf %14, %15 : vector<8x8xf32>
    %cst_19 = arith.constant dense<0xFF800000> : vector<8xf32>
    %17 = vector.multi_reduction <maximumf>, %16, %cst_19 [1] : vector<8x8xf32> to vector<8xf32>
    %18 = vector.shape_cast %17 : vector<8xf32> to vector<8x1xf32>
    %19 = vector.broadcast %18 : vector<8x1xf32> to vector<8x8xf32>
    %20 = arith.subf %16, %19 : vector<8x8xf32>
    %21 = math.exp %20 : vector<8x8xf32>
    %cst_20 = arith.constant dense<0.000000e+00> : vector<8xf32>
    %22 = vector.multi_reduction <add>, %21, %cst_20 [1] : vector<8x8xf32> to vector<8xf32>
    %23 = vector.shape_cast %22 : vector<8xf32> to vector<8x1xf32>
    %24 = vector.broadcast %23 : vector<8x1xf32> to vector<8x8xf32>
    %25 = arith.divf %21, %24 : vector<8x8xf32>
    %cst_21 = arith.constant dense<0.000000e+00> : vector<8x8xf32>
    %26 = tpu.matmul %25, %13, %cst_21 {dimension_numbers = #tpu.dot_dimension_numbers<[1], [0], [0], [1], [0, 0, 1, 1], [], []>} : vector<8x8xf32>, vector<8x8xf32>, vector<8x8xf32> -> vector<8x8xf32>
    %c0_22 = arith.constant 0 : index
    %c0_23 = arith.constant 0 : index
    %c0_24 = arith.constant 0 : index
    %27 = vector.load %arg6[%c0_22, %c0_23, %c0_24] : memref<4x8x32xf32, #tpu.memory_space<vmem>>, vector<1x8x32xf32>
    %28 = vector.shape_cast %27 : vector<1x8x32xf32> to vector<8x32xf32>
    %cst_25 = arith.constant dense<0.000000e+00> : vector<8x32xf32>
    %29 = tpu.matmul %26, %28, %cst_25 {dimension_numbers = #tpu.dot_dimension_numbers<[1], [0], [0], [1], [0, 0, 1, 1], [], []>} : vector<8x8xf32>, vector<8x32xf32>, vector<8x32xf32> -> vector<8x32xf32>
    %30 = arith.addf %4, %29 : vector<8x32xf32>
    %c1 = arith.constant 1 : index
    %c0_26 = arith.constant 0 : index
    %c0_27 = arith.constant 0 : index
    %31 = vector.load %arg3[%c1, %c0_26, %c0_27] : memref<4x32x8xf32, #tpu.memory_space<vmem>>, vector<1x32x8xf32>
    %32 = vector.shape_cast %31 : vector<1x32x8xf32> to vector<32x8xf32>
    %cst_28 = arith.constant dense<0.000000e+00> : vector<8x8xf32>
    %33 = tpu.matmul %1, %32, %cst_28 {dimension_numbers = #tpu.dot_dimension_numbers<[1], [0], [0], [1], [0, 0, 1, 1], [], []>} : vector<8x32xf32>, vector<32x8xf32>, vector<8x8xf32> -> vector<8x8xf32>
    %c1_29 = arith.constant 1 : index
    %c0_30 = arith.constant 0 : index
    %c0_31 = arith.constant 0 : index
    %34 = vector.load %arg4[%c1_29, %c0_30, %c0_31] : memref<4x32x8xf32, #tpu.memory_space<vmem>>, vector<1x32x8xf32>
    %35 = vector.shape_cast %34 : vector<1x32x8xf32> to vector<32x8xf32>
    %cst_32 = arith.constant dense<0.000000e+00> : vector<8x8xf32>
    %36 = tpu.matmul %3, %35, %cst_32 {dimension_numbers = #tpu.dot_dimension_numbers<[1], [0], [0], [1], [0, 0, 1, 1], [], []>} : vector<8x32xf32>, vector<32x8xf32>, vector<8x8xf32> -> vector<8x8xf32>
    %c1_33 = arith.constant 1 : index
    %c0_34 = arith.constant 0 : index
    %c0_35 = arith.constant 0 : index
    %37 = vector.load %arg5[%c1_33, %c0_34, %c0_35] : memref<4x32x8xf32, #tpu.memory_space<vmem>>, vector<1x32x8xf32>
    %38 = vector.shape_cast %37 : vector<1x32x8xf32> to vector<32x8xf32>
    %cst_36 = arith.constant dense<0.000000e+00> : vector<8x8xf32>
    %39 = tpu.matmul %3, %38, %cst_36 {dimension_numbers = #tpu.dot_dimension_numbers<[1], [0], [0], [1], [0, 0, 1, 1], [], []>} : vector<8x32xf32>, vector<32x8xf32>, vector<8x8xf32> -> vector<8x8xf32>
    %cst_37 = arith.constant dense<0.000000e+00> : vector<8x8xf32>
    %40 = tpu.matmul %33, %36, %cst_37 {dimension_numbers = #tpu.dot_dimension_numbers<[1], [1], [0], [0], [0, 0, 1, 0], [], []>} : vector<8x8xf32>, vector<8x8xf32>, vector<8x8xf32> -> vector<8x8xf32>
    %cst_38 = arith.constant 0.353553385 : f32
    %41 = vector.broadcast %cst_38 : f32 to vector<8x8xf32>
    %42 = arith.mulf %40, %41 : vector<8x8xf32>
    %cst_39 = arith.constant dense<0xFF800000> : vector<8xf32>
    %43 = vector.multi_reduction <maximumf>, %42, %cst_39 [1] : vector<8x8xf32> to vector<8xf32>
    %44 = vector.shape_cast %43 : vector<8xf32> to vector<8x1xf32>
    %45 = vector.broadcast %44 : vector<8x1xf32> to vector<8x8xf32>
    %46 = arith.subf %42, %45 : vector<8x8xf32>
    %47 = math.exp %46 : vector<8x8xf32>
    %cst_40 = arith.constant dense<0.000000e+00> : vector<8xf32>
    %48 = vector.multi_reduction <add>, %47, %cst_40 [1] : vector<8x8xf32> to vector<8xf32>
    %49 = vector.shape_cast %48 : vector<8xf32> to vector<8x1xf32>
    %50 = vector.broadcast %49 : vector<8x1xf32> to vector<8x8xf32>
    %51 = arith.divf %47, %50 : vector<8x8xf32>
    %cst_41 = arith.constant dense<0.000000e+00> : vector<8x8xf32>
    %52 = tpu.matmul %51, %39, %cst_41 {dimension_numbers = #tpu.dot_dimension_numbers<[1], [0], [0], [1], [0, 0, 1, 1], [], []>} : vector<8x8xf32>, vector<8x8xf32>, vector<8x8xf32> -> vector<8x8xf32>
    %c1_42 = arith.constant 1 : index
    %c0_43 = arith.constant 0 : index
    %c0_44 = arith.constant 0 : index
    %53 = vector.load %arg6[%c1_42, %c0_43, %c0_44] : memref<4x8x32xf32, #tpu.memory_space<vmem>>, vector<1x8x32xf32>
    %54 = vector.shape_cast %53 : vector<1x8x32xf32> to vector<8x32xf32>
    %cst_45 = arith.constant dense<0.000000e+00> : vector<8x32xf32>
    %55 = tpu.matmul %52, %54, %cst_45 {dimension_numbers = #tpu.dot_dimension_numbers<[1], [0], [0], [1], [0, 0, 1, 1], [], []>} : vector<8x8xf32>, vector<8x32xf32>, vector<8x32xf32> -> vector<8x32xf32>
    %56 = arith.addf %30, %55 : vector<8x32xf32>
    %c2 = arith.constant 2 : index
    %c0_46 = arith.constant 0 : index
    %c0_47 = arith.constant 0 : index
    %57 = vector.load %arg3[%c2, %c0_46, %c0_47] : memref<4x32x8xf32, #tpu.memory_space<vmem>>, vector<1x32x8xf32>
    %58 = vector.shape_cast %57 : vector<1x32x8xf32> to vector<32x8xf32>
    %cst_48 = arith.constant dense<0.000000e+00> : vector<8x8xf32>
    %59 = tpu.matmul %1, %58, %cst_48 {dimension_numbers = #tpu.dot_dimension_numbers<[1], [0], [0], [1], [0, 0, 1, 1], [], []>} : vector<8x32xf32>, vector<32x8xf32>, vector<8x8xf32> -> vector<8x8xf32>
    %c2_49 = arith.constant 2 : index
    %c0_50 = arith.constant 0 : index
    %c0_51 = arith.constant 0 : index
    %60 = vector.load %arg4[%c2_49, %c0_50, %c0_51] : memref<4x32x8xf32, #tpu.memory_space<vmem>>, vector<1x32x8xf32>
    %61 = vector.shape_cast %60 : vector<1x32x8xf32> to vector<32x8xf32>
    %cst_52 = arith.constant dense<0.000000e+00> : vector<8x8xf32>
    %62 = tpu.matmul %3, %61, %cst_52 {dimension_numbers = #tpu.dot_dimension_numbers<[1], [0], [0], [1], [0, 0, 1, 1], [], []>} : vector<8x32xf32>, vector<32x8xf32>, vector<8x8xf32> -> vector<8x8xf32>
    %c2_53 = arith.constant 2 : index
    %c0_54 = arith.constant 0 : index
    %c0_55 = arith.constant 0 : index
    %63 = vector.load %arg5[%c2_53, %c0_54, %c0_55] : memref<4x32x8xf32, #tpu.memory_space<vmem>>, vector<1x32x8xf32>
    %64 = vector.shape_cast %63 : vector<1x32x8xf32> to vector<32x8xf32>
    %cst_56 = arith.constant dense<0.000000e+00> : vector<8x8xf32>
    %65 = tpu.matmul %3, %64, %cst_56 {dimension_numbers = #tpu.dot_dimension_numbers<[1], [0], [0], [1], [0, 0, 1, 1], [], []>} : vector<8x32xf32>, vector<32x8xf32>, vector<8x8xf32> -> vector<8x8xf32>
    %cst_57 = arith.constant dense<0.000000e+00> : vector<8x8xf32>
    %66 = tpu.matmul %59, %62, %cst_57 {dimension_numbers = #tpu.dot_dimension_numbers<[1], [1], [0], [0], [0, 0, 1, 0], [], []>} : vector<8x8xf32>, vector<8x8xf32>, vector<8x8xf32> -> vector<8x8xf32>
    %cst_58 = arith.constant 0.353553385 : f32
    %67 = vector.broadcast %cst_58 : f32 to vector<8x8xf32>
    %68 = arith.mulf %66, %67 : vector<8x8xf32>
    %cst_59 = arith.constant dense<0xFF800000> : vector<8xf32>
    %69 = vector.multi_reduction <maximumf>, %68, %cst_59 [1] : vector<8x8xf32> to vector<8xf32>
    %70 = vector.shape_cast %69 : vector<8xf32> to vector<8x1xf32>
    %71 = vector.broadcast %70 : vector<8x1xf32> to vector<8x8xf32>
    %72 = arith.subf %68, %71 : vector<8x8xf32>
    %73 = math.exp %72 : vector<8x8xf32>
    %cst_60 = arith.constant dense<0.000000e+00> : vector<8xf32>
    %74 = vector.multi_reduction <add>, %73, %cst_60 [1] : vector<8x8xf32> to vector<8xf32>
    %75 = vector.shape_cast %74 : vector<8xf32> to vector<8x1xf32>
    %76 = vector.broadcast %75 : vector<8x1xf32> to vector<8x8xf32>
    %77 = arith.divf %73, %76 : vector<8x8xf32>
    %cst_61 = arith.constant dense<0.000000e+00> : vector<8x8xf32>
    %78 = tpu.matmul %77, %65, %cst_61 {dimension_numbers = #tpu.dot_dimension_numbers<[1], [0], [0], [1], [0, 0, 1, 1], [], []>} : vector<8x8xf32>, vector<8x8xf32>, vector<8x8xf32> -> vector<8x8xf32>
    %c2_62 = arith.constant 2 : index
    %c0_63 = arith.constant 0 : index
    %c0_64 = arith.constant 0 : index
    %79 = vector.load %arg6[%c2_62, %c0_63, %c0_64] : memref<4x8x32xf32, #tpu.memory_space<vmem>>, vector<1x8x32xf32>
    %80 = vector.shape_cast %79 : vector<1x8x32xf32> to vector<8x32xf32>
    %cst_65 = arith.constant dense<0.000000e+00> : vector<8x32xf32>
    %81 = tpu.matmul %78, %80, %cst_65 {dimension_numbers = #tpu.dot_dimension_numbers<[1], [0], [0], [1], [0, 0, 1, 1], [], []>} : vector<8x8xf32>, vector<8x32xf32>, vector<8x32xf32> -> vector<8x32xf32>
    %82 = arith.addf %56, %81 : vector<8x32xf32>
    %c3 = arith.constant 3 : index
    %c0_66 = arith.constant 0 : index
    %c0_67 = arith.constant 0 : index
    %83 = vector.load %arg3[%c3, %c0_66, %c0_67] : memref<4x32x8xf32, #tpu.memory_space<vmem>>, vector<1x32x8xf32>
    %84 = vector.shape_cast %83 : vector<1x32x8xf32> to vector<32x8xf32>
    %cst_68 = arith.constant dense<0.000000e+00> : vector<8x8xf32>
    %85 = tpu.matmul %1, %84, %cst_68 {dimension_numbers = #tpu.dot_dimension_numbers<[1], [0], [0], [1], [0, 0, 1, 1], [], []>} : vector<8x32xf32>, vector<32x8xf32>, vector<8x8xf32> -> vector<8x8xf32>
    %c3_69 = arith.constant 3 : index
    %c0_70 = arith.constant 0 : index
    %c0_71 = arith.constant 0 : index
    %86 = vector.load %arg4[%c3_69, %c0_70, %c0_71] : memref<4x32x8xf32, #tpu.memory_space<vmem>>, vector<1x32x8xf32>
    %87 = vector.shape_cast %86 : vector<1x32x8xf32> to vector<32x8xf32>
    %cst_72 = arith.constant dense<0.000000e+00> : vector<8x8xf32>
    %88 = tpu.matmul %3, %87, %cst_72 {dimension_numbers = #tpu.dot_dimension_numbers<[1], [0], [0], [1], [0, 0, 1, 1], [], []>} : vector<8x32xf32>, vector<32x8xf32>, vector<8x8xf32> -> vector<8x8xf32>
    %c3_73 = arith.constant 3 : index
    %c0_74 = arith.constant 0 : index
    %c0_75 = arith.constant 0 : index
    %89 = vector.load %arg5[%c3_73, %c0_74, %c0_75] : memref<4x32x8xf32, #tpu.memory_space<vmem>>, vector<1x32x8xf32>
    %90 = vector.shape_cast %89 : vector<1x32x8xf32> to vector<32x8xf32>
    %cst_76 = arith.constant dense<0.000000e+00> : vector<8x8xf32>
    %91 = tpu.matmul %3, %90, %cst_76 {dimension_numbers = #tpu.dot_dimension_numbers<[1], [0], [0], [1], [0, 0, 1, 1], [], []>} : vector<8x32xf32>, vector<32x8xf32>, vector<8x8xf32> -> vector<8x8xf32>
    %cst_77 = arith.constant dense<0.000000e+00> : vector<8x8xf32>
    %92 = tpu.matmul %85, %88, %cst_77 {dimension_numbers = #tpu.dot_dimension_numbers<[1], [1], [0], [0], [0, 0, 1, 0], [], []>} : vector<8x8xf32>, vector<8x8xf32>, vector<8x8xf32> -> vector<8x8xf32>
    %cst_78 = arith.constant 0.353553385 : f32
    %93 = vector.broadcast %cst_78 : f32 to vector<8x8xf32>
    %94 = arith.mulf %92, %93 : vector<8x8xf32>
    %cst_79 = arith.constant dense<0xFF800000> : vector<8xf32>
    %95 = vector.multi_reduction <maximumf>, %94, %cst_79 [1] : vector<8x8xf32> to vector<8xf32>
    %96 = vector.shape_cast %95 : vector<8xf32> to vector<8x1xf32>
    %97 = vector.broadcast %96 : vector<8x1xf32> to vector<8x8xf32>
    %98 = arith.subf %94, %97 : vector<8x8xf32>
    %99 = math.exp %98 : vector<8x8xf32>
    %cst_80 = arith.constant dense<0.000000e+00> : vector<8xf32>
    %100 = vector.multi_reduction <add>, %99, %cst_80 [1] : vector<8x8xf32> to vector<8xf32>
    %101 = vector.shape_cast %100 : vector<8xf32> to vector<8x1xf32>
    %102 = vector.broadcast %101 : vector<8x1xf32> to vector<8x8xf32>
    %103 = arith.divf %99, %102 : vector<8x8xf32>
    %cst_81 = arith.constant dense<0.000000e+00> : vector<8x8xf32>
    %104 = tpu.matmul %103, %91, %cst_81 {dimension_numbers = #tpu.dot_dimension_numbers<[1], [0], [0], [1], [0, 0, 1, 1], [], []>} : vector<8x8xf32>, vector<8x8xf32>, vector<8x8xf32> -> vector<8x8xf32>
    %c3_82 = arith.constant 3 : index
    %c0_83 = arith.constant 0 : index
    %c0_84 = arith.constant 0 : index
    %105 = vector.load %arg6[%c3_82, %c0_83, %c0_84] : memref<4x8x32xf32, #tpu.memory_space<vmem>>, vector<1x8x32xf32>
    %106 = vector.shape_cast %105 : vector<1x8x32xf32> to vector<8x32xf32>
    %cst_85 = arith.constant dense<0.000000e+00> : vector<8x32xf32>
    %107 = tpu.matmul %104, %106, %cst_85 {dimension_numbers = #tpu.dot_dimension_numbers<[1], [0], [0], [1], [0, 0, 1, 1], [], []>} : vector<8x8xf32>, vector<8x32xf32>, vector<8x32xf32> -> vector<8x32xf32>
    %108 = arith.addf %82, %107 : vector<8x32xf32>
    %109 = arith.addf %108, %1 : vector<8x32xf32>
    %cst_86 = arith.constant dense<0.000000e+00> : vector<8xf32>
    %110 = vector.multi_reduction <add>, %109, %cst_86 [1] : vector<8x32xf32> to vector<8xf32>
    %111 = vector.shape_cast %110 : vector<8xf32> to vector<8x1xf32>
    %cst_87 = arith.constant 3.200000e+01 : f32
    %112 = vector.broadcast %cst_87 : f32 to vector<8x1xf32>
    %113 = arith.divf %111, %112 : vector<8x1xf32>
    %114 = vector.broadcast %113 : vector<8x1xf32> to vector<8x32xf32>
    %115 = arith.subf %109, %114 : vector<8x32xf32>
    %116 = arith.mulf %115, %115 : vector<8x32xf32>
    %cst_88 = arith.constant dense<0.000000e+00> : vector<8xf32>
    %117 = vector.multi_reduction <add>, %116, %cst_88 [1] : vector<8x32xf32> to vector<8xf32>
    %118 = vector.shape_cast %117 : vector<8xf32> to vector<8x1xf32>
    %cst_89 = arith.constant 3.200000e+01 : f32
    %119 = vector.broadcast %cst_89 : f32 to vector<8x1xf32>
    %120 = arith.divf %118, %119 : vector<8x1xf32>
    %cst_90 = arith.constant 9.99999974E-6 : f32
    %121 = vector.broadcast %cst_90 : f32 to vector<8x1xf32>
    %122 = arith.addf %120, %121 : vector<8x1xf32>
    %123 = math.rsqrt %122 : vector<8x1xf32>
    %124 = vector.broadcast %123 : vector<8x1xf32> to vector<8x32xf32>
    %125 = arith.mulf %115, %124 : vector<8x32xf32>
    %c0_91 = arith.constant 0 : index
    %c0_92 = arith.constant 0 : index
    %c0_93 = arith.constant 0 : index
    %126 = vector.load %arg7[%c0_91, %c0_92, %c0_93] : memref<1x8x32xf32, #tpu.memory_space<vmem>>, vector<1x8x32xf32>
    %127 = vector.shape_cast %126 : vector<1x8x32xf32> to vector<8x32xf32>
    %128 = vector.shape_cast %125 : vector<8x32xf32> to vector<1x8x32xf32>
    tpu.vector_store %arg7[%c0_91, %c0_92, %c0_93], %128 {strides = array<i32>} : memref<1x8x32xf32, #tpu.memory_space<vmem>>, vector<1x8x32xf32>,
    return
  }
  func.func @transform_0(%arg0: i32) -> (i32, i32, i32) {
    %c0_i32 = arith.constant 0 : i32
    %c0_i32_0 = arith.constant 0 : i32
    %c0_i32_1 = arith.constant 0 : i32
    return %arg0, %c0_i32, %c0_i32_0 : i32, i32, i32
  }
  func.func @transform_1(%arg0: i32) -> (i32, i32, i32) {
    %c0_i32 = arith.constant 0 : i32
    %c0_i32_0 = arith.constant 0 : i32
    %c0_i32_1 = arith.constant 0 : i32
    return %arg0, %c0_i32, %c0_i32_0 : i32, i32, i32
  }
  func.func @transform_2(%arg0: i32) -> (i32, i32, i32) {
    %c0_i32 = arith.constant 0 : i32
    %c0_i32_0 = arith.constant 0 : i32
    %c0_i32_1 = arith.constant 0 : i32
    %c0_i32_2 = arith.constant 0 : i32
    return %c0_i32, %c0_i32_0, %c0_i32_1 : i32, i32, i32
  }
  func.func @transform_3(%arg0: i32) -> (i32, i32, i32) {
    %c0_i32 = arith.constant 0 : i32
    %c0_i32_0 = arith.constant 0 : i32
    %c0_i32_1 = arith.constant 0 : i32
    %c0_i32_2 = arith.constant 0 : i32
    return %c0_i32, %c0_i32_0, %c0_i32_1 : i32, i32, i32
  }
  func.func @transform_4(%arg0: i32) -> (i32, i32, i32) {
    %c0_i32 = arith.constant 0 : i32
    %c0_i32_0 = arith.constant 0 : i32
    %c0_i32_1 = arith.constant 0 : i32
    %c0_i32_2 = arith.constant 0 : i32
    return %c0_i32, %c0_i32_0, %c0_i32_1 : i32, i32, i32
  }
  func.func @transform_5(%arg0: i32) -> (i32, i32, i32) {
    %c0_i32 = arith.constant 0 : i32
    %c0_i32_0 = arith.constant 0 : i32
    %c0_i32_1 = arith.constant 0 : i32
    %c0_i32_2 = arith.constant 0 : i32
    return %c0_i32, %c0_i32_0, %c0_i32_1 : i32, i32, i32
  }
  func.func @transform_6(%arg0: i32) -> (i32, i32, i32) {
    %c0_i32 = arith.constant 0 : i32
    %c0_i32_0 = arith.constant 0 : i32
    %c0_i32_1 = arith.constant 0 : i32
    return %arg0, %c0_i32, %c0_i32_0 : i32, i32, i32
  }
}

</mosaic_0001>

<llo_original>
// kernel: tpu_custom_call.1
$region0: #{tpu_custom_call.1}
  #allocation0 [shape = 'u32[]', space=smem, size = 0x4, offset = 0x4, fixed_abs, tag = 'smem constant byte address 0x4 - core index']
  #allocation1 [shape = 'u32[144,128]{1,0:T(1,128)}', space=vmem, size = 0x12000, scoped, tag = 'internal scratch']
  %s0 = inlined_call_operand.vmem [shape: f32[2,8,32], index: 0, kind: input, shape index: {}]
  %s1 = inlined_call_operand.vmem [shape: f32[2,8,32], index: 1, kind: input, shape index: {}]
  %s2 = inlined_call_operand.vmem [shape: f32[4,32,8], index: 2, kind: input, shape index: {}]
  %s3 = inlined_call_operand.vmem [shape: f32[4,32,8], index: 3, kind: input, shape index: {}]
  %s4 = inlined_call_operand.vmem [shape: f32[4,32,8], index: 4, kind: input, shape index: {}]
  %s5 = inlined_call_operand.vmem [shape: f32[4,8,32], index: 5, kind: input, shape index: {}]
  %s6 = inlined_call_operand.hbm [shape: f32[2,8,32], index: 6, kind: output, shape index: {}]
  %s7 = sld [smem:[#allocation0]]
  $region57: #{tpu_custom_call.1} parent=0
    _
  %s9 = ssub.s32 1, %s7
  %s10 = scalar_select 0, %s9, %s7
  $region1: #{tpu_custom_call.1} parent=0
    #allocation2 [shape = 'u8[8192]{0}', space=vmem, size = 0x2000, scoped, tag = 'output window, operand 0']
    #allocation3 [shape = 's32[2]{0}', space=sflag, size = 0x8, scoped, tag = 'scoped memory for tpu_custom_call.1']
    %11 = vsyncpa [#allocation3], 0
    %s12 = scalar_lea.sflag [#allocation3], 1
    %13 = vsyncpa %s12, 0
    loop: start=0, step=1, limit=4
    $region2: #{tpu_custom_call.1} parent=1 // loop_pre_header
      _
    $region3: #{tpu_custom_call.1} parent=1 // loop_header
      %s15 = sphi 0, %s19
      %p16 = scmp.ge.s32.totalorder %s15, 4
      %s25 = sphi 0, %s27
      %s28 = sphi 0, %s25
      %s29 = sphi 0, %s28
      %s45 = sphi 0, %s29
      %s51 = sphi 0, %s53
      %s54 = sphi 0, %s51
      %s55 = sphi 0, %s54
      %s71 = sphi 0, %s55
      %s75 = sphi 0, %s75
      %s77 = sphi 0, %s75
      %s78 = sphi 0, %s77
      %s92 = sphi 0, %s78
      %s96 = sphi 0, %s96
      %s98 = sphi 0, %s96
      %s99 = sphi 0, %s98
      %s113 = sphi 0, %s99
      %s117 = sphi 0, %s117
      %s119 = sphi 0, %s117
      %s120 = sphi 0, %s119
      %s134 = sphi 0, %s120
      %s138 = sphi 0, %s138
      %s140 = sphi 0, %s138
      %s141 = sphi 0, %s140
      %s155 = sphi 0, %s141
      %s161 = sphi 0, %s163
      %s164 = sphi 0, %s161
      %s165 = sphi 0, %s164
      %s181 = sphi 0, %s165
    $region4: #{tpu_custom_call.1} parent=1 // loop_header_branch
      %18 = sbr.rel (%p16) target = $region8
    $region5: #{tpu_custom_call.1} parent=1 // loop_body
      %s20 = ssub.s32 %s15, 1
      %s21 = ssub.s32 %s15, 2
      %s22 = sadd.s32 %s15, 1
      %s23 = ssub.s32 %s15, %s22
      %p24 = scmp.eq.s32.totalorder %s23, 0
      %s26 = sadd.s32 %s25, 1
      %s27 = scalar_select %p24, %s25, %s26
      %p30 = pneg %p24
      %p31 = scmp.eq.s32.totalorder %s15, 1
      %p32 = por %p30, %p31
      %p33 = scmp.ne.s32.totalorder %s25, %s28
      %p34 = scmp.eq.s32.totalorder %s15, 0
      %p35 = por %p33, %p34
      %p36 = scmp.ne.s32.totalorder %s25, %s28
      %p37 = scmp.eq.s32.totalorder %s20, 1
      %p38 = por %p36, %p37
      %p39 = scmp.ne.s32.totalorder %s28, %s29
      %p40 = scmp.eq.s32.totalorder %s20, 0
      %p41 = por %p39, %p40
      %p42 = scmp.ne.s32.totalorder %s28, %s29
      %p43 = scmp.eq.s32.totalorder %s21, 1
      %p44 = por %p42, %p43
      %p46 = scmp.ne.s32.totalorder %s29, %s45
      %p47 = scmp.eq.s32.totalorder %s21, 0
      %p48 = por %p46, %p47
      %s49 = ssub.s32 %s15, %s22
      %p50 = scmp.eq.s32.totalorder %s49, 0
      %s52 = sadd.s32 %s51, 1
      %s53 = scalar_select %p50, %s51, %s52
      %p56 = pneg %p50
      %p57 = scmp.eq.s32.totalorder %s15, 1
      %p58 = por %p56, %p57
      %p59 = scmp.ne.s32.totalorder %s51, %s54
      %p60 = scmp.eq.s32.totalorder %s15, 0
      %p61 = por %p59, %p60
      %p62 = scmp.ne.s32.totalorder %s51, %s54
      %p63 = scmp.eq.s32.totalorder %s20, 1
      %p64 = por %p62, %p63
      %p65 = scmp.ne.s32.totalorder %s54, %s55
      %p66 = scmp.eq.s32.totalorder %s20, 0
      %p67 = por %p65, %p66
      %p68 = scmp.ne.s32.totalorder %s54, %s55
      %p69 = scmp.eq.s32.totalorder %s21, 1
      %p70 = por %p68, %p69
      %p72 = scmp.ne.s32.totalorder %s55, %s71
      %p73 = scmp.eq.s32.totalorder %s21, 0
      %p74 = por %p72, %p73
      %s76 = sadd.s32 %s75, 1
      %p79 = scmp.eq.s32.totalorder %s15, 1
      %p80 = scmp.ne.s32.totalorder %s75, %s77
      %p81 = scmp.eq.s32.totalorder %s15, 0
      %p82 = por %p80, %p81
      %p83 = scmp.ne.s32.totalorder %s75, %s77
      %p84 = scmp.eq.s32.totalorder %s20, 1
      %p85 = por %p83, %p84
      %p86 = scmp.ne.s32.totalorder %s77, %s78
      %p87 = scmp.eq.s32.totalorder %s20, 0
      %p88 = por %p86, %p87
      %p89 = scmp.ne.s32.totalorder %s77, %s78
      %p90 = scmp.eq.s32.totalorder %s21, 1
      %p91 = por %p89, %p90
      %p93 = scmp.ne.s32.totalorder %s78, %s92
      %p94 = scmp.eq.s32.totalorder %s21, 0
      %p95 = por %p93, %p94
      %s97 = sadd.s32 %s96, 1
      %p100 = scmp.eq.s32.totalorder %s15, 1
      %p101 = scmp.ne.s32.totalorder %s96, %s98
      %p102 = scmp.eq.s32.totalorder %s15, 0
      %p103 = por %p101, %p102
      %p104 = scmp.ne.s32.totalorder %s96, %s98
      %p105 = scmp.eq.s32.totalorder %s20, 1
      %p106 = por %p104, %p105
      %p107 = scmp.ne.s32.totalorder %s98, %s99
      %p108 = scmp.eq.s32.totalorder %s20, 0
      %p109 = por %p107, %p108
      %p110 = scmp.ne.s32.totalorder %s98, %s99
      %p111 = scmp.eq.s32.totalorder %s21, 1
      %p112 = por %p110, %p111
      %p114 = scmp.ne.s32.totalorder %s99, %s113
      %p115 = scmp.eq.s32.totalorder %s21, 0
      %p116 = por %p114, %p115
      %s118 = sadd.s32 %s117, 1
      %p121 = scmp.eq.s32.totalorder %s15, 1
      %p122 = scmp.ne.s32.totalorder %s117, %s119
      %p123 = scmp.eq.s32.totalorder %s15, 0
      %p124 = por %p122, %p123
      %p125 = scmp.ne.s32.totalorder %s117, %s119
      %p126 = scmp.eq.s32.totalorder %s20, 1
      %p127 = por %p125, %p126
      %p128 = scmp.ne.s32.totalorder %s119, %s120
      %p129 = scmp.eq.s32.totalorder %s20, 0
      %p130 = por %p128, %p129
      %p131 = scmp.ne.s32.totalorder %s119, %s120
      %p132 = scmp.eq.s32.totalorder %s21, 1
      %p133 = por %p131, %p132
      %p135 = scmp.ne.s32.totalorder %s120, %s134
      %p136 = scmp.eq.s32.totalorder %s21, 0
      %p137 = por %p135, %p136
      %s139 = sadd.s32 %s138, 1
      %p142 = scmp.eq.s32.totalorder %s15, 1
      %p143 = scmp.ne.s32.totalorder %s138, %s140
      %p144 = scmp.eq.s32.totalorder %s15, 0
      %p145 = por %p143, %p144
      %p146 = scmp.ne.s32.totalorder %s138, %s140
      %p147 = scmp.eq.s32.totalorder %s20, 1
      %p148 = por %p146, %p147
      %p149 = scmp.ne.s32.totalorder %s140, %s141
      %p150 = scmp.eq.s32.totalorder %s20, 0
      %p151 = por %p149, %p150
      %p152 = scmp.ne.s32.totalorder %s140, %s141
      %p153 = scmp.eq.s32.totalorder %s21, 1
      %p154 = por %p152, %p153
      %p156 = scmp.ne.s32.totalorder %s141, %s155
      %p157 = scmp.eq.s32.totalorder %s21, 0
      %p158 = por %p156, %p157
      %s159 = ssub.s32 %s15, %s22
      %p160 = scmp.eq.s32.totalorder %s159, 0
      %s162 = sadd.s32 %s161, 1
      %s163 = scalar_select %p160, %s161, %s162
      %p166 = pneg %p160
      %p167 = scmp.eq.s32.totalorder %s15, 1
      %p168 = por %p166, %p167
      %p169 = scmp.ne.s32.totalorder %s161, %s164
      %p170 = scmp.eq.s32.totalorder %s15, 0
      %p171 = por %p169, %p170
      %p172 = scmp.ne.s32.totalorder %s161, %s164
      %p173 = scmp.eq.s32.totalorder %s20, 1
      %p174 = por %p172, %p173
      %p175 = scmp.ne.s32.totalorder %s164, %s165
      %p176 = scmp.eq.s32.totalorder %s20, 0
      %p177 = por %p175, %p176
      %p178 = scmp.ne.s32.totalorder %s164, %s165
      %p179 = scmp.eq.s32.totalorder %s21, 1
      %p180 = por %p178, %p179
      %p182 = scmp.ne.s32.totalorder %s165, %s181
      %p183 = scmp.eq.s32.totalorder %s21, 0
      %p184 = por %p182, %p183
      %p185 = scmp.le.s32.totalorder 1, %s15
      %p186 = scmp.lt.s32.totalorder %s15, 3
      %p187 = pnand %p185, %p186
      %p188 = pneg %p187
      // Predicated region
      $region9: #{tpu_custom_call.1} parent=5 // pred_check
        _
      $region10: #{tpu_custom_call.1} parent=5 // pred_check_branch
        %190 = sbr.rel (%p187) target = $region12
      $region11: #{tpu_custom_call.1} parent=5 // pred_region
        %s191 = ssub.s32 %s15, 1
        // Predicated region
        $region13: #{tpu_custom_call.1} parent=11 // pred_check
          %p192 = pneg %p88
        $region14: #{tpu_custom_call.1} parent=11 // pred_check_branch
          %194 = sbr.rel (%p192) target = $region16
        $region15: #{tpu_custom_call.1} parent=11 // pred_region
          _
        $region16: #{tpu_custom_call.1} parent=11 // pred_fallthru
          _
        // Predicated region
        $region17: #{tpu_custom_call.1} parent=11 // pred_check
          %p195 = pneg %p109
        $region18: #{tpu_custom_call.1} parent=11 // pred_check_branch
          %197 = sbr.rel (%p195) target = $region20
        $region19: #{tpu_custom_call.1} parent=11 // pred_region
          _
        $region20: #{tpu_custom_call.1} parent=11 // pred_fallthru
          _
        // Predicated region
        $region21: #{tpu_custom_call.1} parent=11 // pred_check
          %p198 = pneg %p130
        $region22: #{tpu_custom_call.1} parent=11 // pred_check_branch
          %200 = sbr.rel (%p198) target = $region24
        $region23: #{tpu_custom_call.1} parent=11 // pred_region
          _
        $region24: #{tpu_custom_call.1} parent=11 // pred_fallthru
          _
        // Predicated region
        $region25: #{tpu_custom_call.1} parent=11 // pred_check
          %p201 = pneg %p151
        $region26: #{tpu_custom_call.1} parent=11 // pred_check_branch
          %203 = sbr.rel (%p201) target = $region28
        $region27: #{tpu_custom_call.1} parent=11 // pred_region
          _
        $region28: #{tpu_custom_call.1} parent=11 // pred_fallthru
          _
      $region12: #{tpu_custom_call.1} parent=5 // pred_fallthru
        _
      %p204 = scmp.lt.s32.totalorder %s15, 2
      // Predicated region
      $region29: #{tpu_custom_call.1} parent=5 // pred_check
        %p205 = pneg %p204
      $region30: #{tpu_custom_call.1} parent=5 // pred_check_branch
        %207 = sbr.rel (%p205) target = $region32
      $region31: #{tpu_custom_call.1} parent=5 // pred_region
        // Predicated region
        $region33: #{tpu_custom_call.1} parent=31 // pred_check
          %p208 = pneg %p35
        $region34: #{tpu_custom_call.1} parent=31 // pred_check_branch
          %210 = sbr.rel (%p208) target = $region36
        $region35: #{tpu_custom_call.1} parent=31 // pred_region
          %p211 = scmp.lt.s32.totalorder %s15, 1
          %s212 = scalar_select %p211, %s15, 1
          %s213 = smul.addr %s212, 8
          %s214 = scalar_lea.vmem %s0, %s213
        $region36: #{tpu_custom_call.1} parent=31 // pred_fallthru
          _
        // Predicated region
        $region37: #{tpu_custom_call.1} parent=31 // pred_check
          %p215 = pneg %p61
        $region38: #{tpu_custom_call.1} parent=31 // pred_check_branch
          %217 = sbr.rel (%p215) target = $region40
        $region39: #{tpu_custom_call.1} parent=31 // pred_region
          %p218 = scmp.lt.s32.totalorder %s15, 1
          %s219 = scalar_select %p218, %s15, 1
          %s220 = smul.addr %s219, 8
          %s221 = scalar_lea.vmem %s1, %s220
        $region40: #{tpu_custom_call.1} parent=31 // pred_fallthru
          _
      $region32: #{tpu_custom_call.1} parent=5 // pred_fallthru
        _
      %p222 = scmp.le.s32.totalorder 1, %s15
      %p223 = scmp.lt.s32.totalorder %s15, 3
      %p224 = pnand %p222, %p223
      %p225 = pneg %p224
      // Predicated region
      $region41: #{tpu_custom_call.1} parent=5 // pred_check
        _
      $region42: #{tpu_custom_call.1} parent=5 // pred_check_branch
        %227 = sbr.rel (%p224) target = $region44
      $region43: #{tpu_custom_call.1} parent=5 // pred_region
        %s228 = ssub.s32 %s15, 1
        %p229 = scmp.lt.s32.totalorder %s20, 1
        %s230 = scalar_select %p229, %s20, 1
        %s231 = smul.addr %s230, 8
        %s232 = scalar_lea.vmem %s0, %s231
        %p233 = pneg %p41
        %p234 = pneg %p38
        %p235 = scmp.lt.s32.totalorder %s20, 1
        %s236 = scalar_select %p235, %s20, 1
        %s237 = smul.addr %s236, 8
        %s238 = scalar_lea.vmem %s1, %s237
        %p239 = pneg %p67
        %p240 = pneg %p64
        %p241 = pneg %p88
        %p242 = pneg %p85
        %p243 = pneg %p109
        %p244 = pneg %p106
        %p245 = pneg %p130
        %p246 = pneg %p127
        %p247 = pneg %p151
        %p248 = pneg %p148
        %p249 = pneg %p177
        %p250 = pneg %p174
        %s251 = sand.u32 %s164, 1
        %s252 = scalar_lea.sflag [#allocation3], %s251
        %s253 = sand.u32 %s164, 1
        %s254 = smul.addr %s253, 8
        %s255 = scalar_lea.vmem [#allocation2], %s254
        %p256 = scmp.lt.s32.totalorder %s20, 1
        %s257 = scalar_select %p256, %s20, 1
        %s258 = smul.addr %s257, 8
        %s259 = scalar_lea.vmem %s0, %s258
        %p260 = scmp.lt.s32.totalorder %s20, 1
        %s261 = scalar_select %p260, %s20, 1
        %s262 = smul.addr %s261, 8
        %s263 = scalar_lea.vmem %s1, %s262
        %v264 = vld [vmem:[%s259] sm:$0xff]
        %v265 = vld [vmem:[%s263] sm:$0xff]
        %v266 = vld [vmem:[%s2] sm:$0xff]
        %v267 = vld [vmem:[%s2 + $0x8] sm:$0xff]
        %v268 = vld [vmem:[%s2 + $0x10] sm:$0xff]
        %v269 = vld [vmem:[%s2 + $0x18] sm:$0xff]
        %vm270 = vcmask 261120
        %v272 = vsel %vm270, %v264, 0
        %274 = vmatprep.subr.mxu0 0.0
        %275 = vmatpush1.msra.mxu0 0.0
        %276 = vmatprep.subr.mxu0 0.0
        %277 = vmatpush1.msra.mxu0 0.0
        %278 = vmatprep.subr.mxu0 0.0
        %279 = vmatpush1.msra.mxu0 0.0
        %280 = vmatprep.subr.mxu0 0.0
        %281 = vmatpush1.msra.mxu0 0.0
        %282 = vmatprep.subr.mxu0 0.0
        %283 = vmatpush1.msra.mxu0 0.0
        %284 = vmatprep.subr.mxu0 0.0
        %285 = vmatpush1.msra.mxu0 0.0
        %286 = vmatprep.subr.mxu0 0.0
        %287 = vmatpush1.msra.mxu0 0.0
        %288 = vmatprep.subr.mxu0 0.0
        %289 = vmatpush1.msra.mxu0 0.0
        %290 = vmatprep.subr.mxu0 0.0
        %291 = vmatpush1.msra.mxu0 0.0
        %292 = vmatprep.subr.mxu0 0.0
        %293 = vmatpush1.msra.mxu0 0.0
        %294 = vmatprep.subr.mxu0 0.0
        %295 = vmatpush1.msra.mxu0 0.0
        %296 = vmatprep.subr.mxu0 0.0
        %297 = vmatpush1.msra.mxu0 0.0
        %298 = vmatprep.subr.mxu0 0.0
        %299 = vmatpush1.msra.mxu0 %v269
        %300 = vmatprep.subr.mxu0 0.0
        %301 = vmatpush1.msra.mxu0 %v268
        %302 = vmatprep.subr.mxu0 0.0
        %303 = vmatpush1.msra.mxu0 %v267
        %304 = vmatprep.subr.mxu0 0.0
        %305 = vmatpush1.msra.mxu0 %v266
        %306 = vmatprep.subr.mxu0 0.0
        %307 = vmatpush2.msra.mxu0 0.0
        %308 = vmatprep.subr.mxu0 0.0
        %309 = vmatpush2.msra.mxu0 0.0
        %310 = vmatprep.subr.mxu0 0.0
        %311 = vmatpush2.msra.mxu0 0.0
        %312 = vmatprep.subr.mxu0 0.0
        %313 = vmatpush2.msra.mxu0 0.0
        %314 = vmatprep.subr.mxu0 0.0
        %315 = vmatpush2.msra.mxu0 0.0
        %316 = vmatprep.subr.mxu0 0.0
        %317 = vmatpush2.msra.mxu0 0.0
        %318 = vmatprep.subr.mxu0 0.0
        %319 = vmatpush2.msra.mxu0 0.0
        %320 = vmatprep.subr.mxu0 0.0
        %321 = vmatpush2.msra.mxu0 0.0
        %322 = vmatprep.subr.mxu0 0.0
        %323 = vmatpush2.msra.mxu0 0.0
        %324 = vmatprep.subr.mxu0 0.0
        %325 = vmatpush2.msra.mxu0 0.0
        %326 = vmatprep.subr.mxu0 0.0
        %327 = vmatpush2.msra.mxu0 0.0
        %328 = vmatprep.subr.mxu0 0.0
        %329 = vmatpush2.msra.mxu0 0.0
        %330 = vmatprep.subr.mxu0 0.0
        %331 = vmatpush2.msra.mxu0 0.0
        %332 = vmatprep.subr.mxu0 0.0
        %333 = vmatpush2.msra.mxu0 0.0
        %334 = vmatprep.subr.mxu0 0.0
        %335 = vmatpush2.msra.mxu0 0.0
        %336 = vmatprep.subr.mxu0 0.0
        %337 = vmatpush2.msra.mxu0 0.0
        %338 = vmatprep.mubr.f32.mxu0 0.0
        %339 = vmatmul.mubr.f32.gmra.mxu0 %v272
        %v340 = vpop.f32.mrf.mxu0
        %v341 = vadd.f32 0.0, %v340
        %v342 = vpop.f32.mrf.mxu0
        %343 = vdwg.mxu0
        %v344 = vld [vmem:[%s3] sm:$0xff]
        %v345 = vld [vmem:[%s3 + $0x8] sm:$0xff]
        %v346 = vld [vmem:[%s3 + $0x10] sm:$0xff]
        %v347 = vld [vmem:[%s3 + $0x18] sm:$0xff]
        %v349 = vsel %vm270, %v265, 0
        %351 = vmatprep.subr.mxu0 0.0
        %352 = vmatpush1.msra.mxu0 0.0
        %353 = vmatprep.subr.mxu0 0.0
        %354 = vmatpush1.msra.mxu0 0.0
        %355 = vmatprep.subr.mxu0 0.0
        %356 = vmatpush1.msra.mxu0 0.0
        %357 = vmatprep.subr.mxu0 0.0
        %358 = vmatpush1.msra.mxu0 0.0
        %359 = vmatprep.subr.mxu0 0.0
        %360 = vmatpush1.msra.mxu0 0.0
        %361 = vmatprep.subr.mxu0 0.0
        %362 = vmatpush1.msra.mxu0 0.0
        %363 = vmatprep.subr.mxu0 0.0
        %364 = vmatpush1.msra.mxu0 0.0
        %365 = vmatprep.subr.mxu0 0.0
        %366 = vmatpush1.msra.mxu0 0.0
        %367 = vmatprep.subr.mxu0 0.0
        %368 = vmatpush1.msra.mxu0 0.0
        %369 = vmatprep.subr.mxu0 0.0
        %370 = vmatpush1.msra.mxu0 0.0
        %371 = vmatprep.subr.mxu0 0.0
        %372 = vmatpush1.msra.mxu0 0.0
        %373 = vmatprep.subr.mxu0 0.0
        %374 = vmatpush1.msra.mxu0 0.0
        %375 = vmatprep.subr.mxu0 0.0
        %376 = vmatpush1.msra.mxu0 %v347
        %377 = vmatprep.subr.mxu0 0.0
        %378 = vmatpush1.msra.mxu0 %v346
        %379 = vmatprep.subr.mxu0 0.0
        %380 = vmatpush1.msra.mxu0 %v345
        %381 = vmatprep.subr.mxu0 0.0
        %382 = vmatpush1.msra.mxu0 %v344
        %383 = vmatprep.subr.mxu0 0.0
        %384 = vmatpush2.msra.mxu0 0.0
        %385 = vmatprep.subr.mxu0 0.0
        %386 = vmatpush2.msra.mxu0 0.0
        %387 = vmatprep.subr.mxu0 0.0
        %388 = vmatpush2.msra.mxu0 0.0
        %389 = vmatprep.subr.mxu0 0.0
        %390 = vmatpush2.msra.mxu0 0.0
        %391 = vmatprep.subr.mxu0 0.0
        %392 = vmatpush2.msra.mxu0 0.0
        %393 = vmatprep.subr.mxu0 0.0
        %394 = vmatpush2.msra.mxu0 0.0
        %395 = vmatprep.subr.mxu0 0.0
        %396 = vmatpush2.msra.mxu0 0.0
        %397 = vmatprep.subr.mxu0 0.0
        %398 = vmatpush2.msra.mxu0 0.0
        %399 = vmatprep.subr.mxu0 0.0
        %400 = vmatpush2.msra.mxu0 0.0
        %401 = vmatprep.subr.mxu0 0.0
        %402 = vmatpush2.msra.mxu0 0.0
        %403 = vmatprep.subr.mxu0 0.0
        %404 = vmatpush2.msra.mxu0 0.0
        %405 = vmatprep.subr.mxu0 0.0
        %406 = vmatpush2.msra.mxu0 0.0
        %407 = vmatprep.subr.mxu0 0.0
        %408 = vmatpush2.msra.mxu0 0.0
        %409 = vmatprep.subr.mxu0 0.0
        %410 = vmatpush2.msra.mxu0 0.0
        %411 = vmatprep.subr.mxu0 0.0
        %412 = vmatpush2.msra.mxu0 0.0
        %413 = vmatprep.subr.mxu0 0.0
        %414 = vmatpush2.msra.mxu0 0.0
        %415 = vmatprep.mubr.f32.mxu0 0.0
        %416 = vmatmul.mubr.f32.gmra.mxu0 %v349
        %v417 = vpop.f32.mrf.mxu0
        %v418 = vadd.f32 0.0, %v417
        %v419 = vpop.f32.mrf.mxu0
        %420 = vdwg.mxu0
        %v421 = vld [vmem:[%s4] sm:$0xff]
        %v422 = vld [vmem:[%s4 + $0x8] sm:$0xff]
        %v423 = vld [vmem:[%s4 + $0x10] sm:$0xff]
        %v424 = vld [vmem:[%s4 + $0x18] sm:$0xff]
        %425 = vmatprep.subr.mxu0 0.0
        %426 = vmatpush1.msra.mxu0 0.0
        %427 = vmatprep.subr.mxu0 0.0
        %428 = vmatpush1.msra.mxu0 0.0
        %429 = vmatprep.subr.mxu0 0.0
        %430 = vmatpush1.msra.mxu0 0.0
        %431 = vmatprep.subr.mxu0 0.0
        %432 = vmatpush1.msra.mxu0 0.0
        %433 = vmatprep.subr.mxu0 0.0
        %434 = vmatpush1.msra.mxu0 0.0
        %435 = vmatprep.subr.mxu0 0.0
        %436 = vmatpush1.msra.mxu0 0.0
        %437 = vmatprep.subr.mxu0 0.0
        %438 = vmatpush1.msra.mxu0 0.0
        %439 = vmatprep.subr.mxu0 0.0
        %440 = vmatpush1.msra.mxu0 0.0
        %441 = vmatprep.subr.mxu0 0.0
        %442 = vmatpush1.msra.mxu0 0.0
        %443 = vmatprep.subr.mxu0 0.0
        %444 = vmatpush1.msra.mxu0 0.0
        %445 = vmatprep.subr.mxu0 0.0
        %446 = vmatpush1.msra.mxu0 0.0
        %447 = vmatprep.subr.mxu0 0.0
        %448 = vmatpush1.msra.mxu0 0.0
        %449 = vmatprep.subr.mxu0 0.0
        %450 = vmatpush1.msra.mxu0 %v424
        %451 = vmatprep.subr.mxu0 0.0
        %452 = vmatpush1.msra.mxu0 %v423
        %453 = vmatprep.subr.mxu0 0.0
        %454 = vmatpush1.msra.mxu0 %v422
        %455 = vmatprep.subr.mxu0 0.0
        %456 = vmatpush1.msra.mxu0 %v421
        %457 = vmatprep.subr.mxu0 0.0
        %458 = vmatpush2.msra.mxu0 0.0
        %459 = vmatprep.subr.mxu0 0.0
        %460 = vmatpush2.msra.mxu0 0.0
        %461 = vmatprep.subr.mxu0 0.0
        %462 = vmatpush2.msra.mxu0 0.0
        %463 = vmatprep.subr.mxu0 0.0
        %464 = vmatpush2.msra.mxu0 0.0
        %465 = vmatprep.subr.mxu0 0.0
        %466 = vmatpush2.msra.mxu0 0.0
        %467 = vmatprep.subr.mxu0 0.0
        %468 = vmatpush2.msra.mxu0 0.0
        %469 = vmatprep.subr.mxu0 0.0
        %470 = vmatpush2.msra.mxu0 0.0
        %471 = vmatprep.subr.mxu0 0.0
        %472 = vmatpush2.msra.mxu0 0.0
        %473 = vmatprep.subr.mxu0 0.0
        %474 = vmatpush2.msra.mxu0 0.0
        %475 = vmatprep.subr.mxu0 0.0
        %476 = vmatpush2.msra.mxu0 0.0
        %477 = vmatprep.subr.mxu0 0.0
        %478 = vmatpush2.msra.mxu0 0.0
        %479 = vmatprep.subr.mxu0 0.0
        %480 = vmatpush2.msra.mxu0 0.0
        %481 = vmatprep.subr.mxu0 0.0
        %482 = vmatpush2.msra.mxu0 0.0
        %483 = vmatprep.subr.mxu0 0.0
        %484 = vmatpush2.msra.mxu0 0.0
        %485 = vmatprep.subr.mxu0 0.0
        %486 = vmatpush2.msra.mxu0 0.0
        %487 = vmatprep.subr.mxu0 0.0
        %488 = vmatpush2.msra.mxu0 0.0
        %489 = vmatprep.mubr.f32.mxu0 0.0
        %490 = vmatmul.mubr.f32.gmra.mxu0 %v349
        %v491 = vpop.f32.mrf.mxu0
        %v492 = vadd.f32 0.0, %v491
        %v493 = vpop.f32.mrf.mxu0
        %494 = vdwg.mxu0
        %vm495 = vcmask 64512
        %v497 = vsel %vm495, %v341, 0
        %v500 = vsel %vm495, %v418, 0
        %502 = vmatprep.subr.mxu0 0.0
        %503 = vmatpush1.xpose.msra.mxu0 0.0
        %504 = vmatprep.subr.mxu0 0.0
        %505 = vmatpush1.xpose.msra.mxu0 0.0
        %506 = vmatprep.subr.mxu0 0.0
        %507 = vmatpush1.xpose.msra.mxu0 0.0
        %508 = vmatprep.subr.mxu0 0.0
        %509 = vmatpush1.xpose.msra.mxu0 0.0
        %510 = vmatprep.subr.mxu0 0.0
        %511 = vmatpush1.xpose.msra.mxu0 0.0
        %512 = vmatprep.subr.mxu0 0.0
        %513 = vmatpush1.xpose.msra.mxu0 0.0
        %514 = vmatprep.subr.mxu0 0.0
        %515 = vmatpush1.xpose.msra.mxu0 0.0
        %516 = vmatprep.subr.mxu0 0.0
        %517 = vmatpush1.xpose.msra.mxu0 0.0
        %518 = vmatprep.subr.mxu0 0.0
        %519 = vmatpush1.xpose.msra.mxu0 0.0
        %520 = vmatprep.subr.mxu0 0.0
        %521 = vmatpush1.xpose.msra.mxu0 0.0
        %522 = vmatprep.subr.mxu0 0.0
        %523 = vmatpush1.xpose.msra.mxu0 0.0
        %524 = vmatprep.subr.mxu0 0.0
        %525 = vmatpush1.xpose.msra.mxu0 0.0
        %526 = vmatprep.subr.mxu0 0.0
        %527 = vmatpush1.xpose.msra.mxu0 0.0
        %528 = vmatprep.subr.mxu0 0.0
        %529 = vmatpush1.xpose.msra.mxu0 0.0
        %530 = vmatprep.subr.mxu0 0.0
        %531 = vmatpush1.xpose.msra.mxu0 0.0
        %532 = vmatprep.subr.mxu0 0.0
        %533 = vmatpush1.xpose.msra.mxu0 %v500
        %534 = vmatprep.subr.mxu0 0.0
        %535 = vmatpush2.xpose.msra.mxu0 0.0
        %536 = vmatprep.subr.mxu0 0.0
        %537 = vmatpush2.xpose.msra.mxu0 0.0
        %538 = vmatprep.subr.mxu0 0.0
        %539 = vmatpush2.xpose.msra.mxu0 0.0
        %540 = vmatprep.subr.mxu0 0.0
        %541 = vmatpush2.xpose.msra.mxu0 0.0
        %542 = vmatprep.subr.mxu0 0.0
        %543 = vmatpush2.xpose.msra.mxu0 0.0
        %544 = vmatprep.subr.mxu0 0.0
        %545 = vmatpush2.xpose.msra.mxu0 0.0
        %546 = vmatprep.subr.mxu0 0.0
        %547 = vmatpush2.xpose.msra.mxu0 0.0
        %548 = vmatprep.subr.mxu0 0.0
        %549 = vmatpush2.xpose.msra.mxu0 0.0
        %550 = vmatprep.subr.mxu0 0.0
        %551 = vmatpush2.xpose.msra.mxu0 0.0
        %552 = vmatprep.subr.mxu0 0.0
        %553 = vmatpush2.xpose.msra.mxu0 0.0
        %554 = vmatprep.subr.mxu0 0.0
        %555 = vmatpush2.xpose.msra.mxu0 0.0
        %556 = vmatprep.subr.mxu0 0.0
        %557 = vmatpush2.xpose.msra.mxu0 0.0
        %558 = vmatprep.subr.mxu0 0.0
        %559 = vmatpush2.xpose.msra.mxu0 0.0
        %560 = vmatprep.subr.mxu0 0.0
        %561 = vmatpush2.xpose.msra.mxu0 0.0
        %562 = vmatprep.subr.mxu0 0.0
        %563 = vmatpush2.xpose.msra.mxu0 0.0
        %564 = vmatprep.subr.mxu0 0.0
        %565 = vmatpush2.xpose.msra.mxu0 0.0
        %566 = vmatprep.mubr.f32.mxu0 0.0
        %567 = vmatmul.mubr.f32.gmra.mxu0 %v497
        %v568 = vpop.f32.mrf.mxu0
        %v569 = vadd.f32 0.0, %v568
        %v570 = vpop.f32.mrf.mxu0
        %571 = vdwg.mxu0
        %v572 = vmul.f32 %v569, 0.35355338
        %v573 = vsel %vm495, %v572, -inf
        %574 = vmax.xlane.f32.xlu0 %v573
        %v575 = vpop.xlane.xlu0 %574
        %v576 = vsub.f32 %v572, %v575
        %v577 = vmul.f32 %v576, 1.442695
        %v578 = vpow.pop %v577
        %v579 = vsel %vm495, %v578, 0.0
        %580 = vadd.xlane.f32.xlu0 %v579
        %v581 = vpop.xlane.xlu0 %580
        %v582 = vrcp.pop %v581
        %v583 = vmul.f32 %v578, %v582
        %v585 = vsel %vm495, %v583, 0
        %587 = vmatprep.subr.mxu0 0.0
        %588 = vmatpush1.msra.mxu0 0.0
        %589 = vmatprep.subr.mxu0 0.0
        %590 = vmatpush1.msra.mxu0 0.0
        %591 = vmatprep.subr.mxu0 0.0
        %592 = vmatpush1.msra.mxu0 0.0
        %593 = vmatprep.subr.mxu0 0.0
        %594 = vmatpush1.msra.mxu0 0.0
        %595 = vmatprep.subr.mxu0 0.0
        %596 = vmatpush1.msra.mxu0 0.0
        %597 = vmatprep.subr.mxu0 0.0
        %598 = vmatpush1.msra.mxu0 0.0
        %599 = vmatprep.subr.mxu0 0.0
        %600 = vmatpush1.msra.mxu0 0.0
        %601 = vmatprep.subr.mxu0 0.0
        %602 = vmatpush1.msra.mxu0 0.0
        %603 = vmatprep.subr.mxu0 0.0
        %604 = vmatpush1.msra.mxu0 0.0
        %605 = vmatprep.subr.mxu0 0.0
        %606 = vmatpush1.msra.mxu0 0.0
        %607 = vmatprep.subr.mxu0 0.0
        %608 = vmatpush1.msra.mxu0 0.0
        %609 = vmatprep.subr.mxu0 0.0
        %610 = vmatpush1.msra.mxu0 0.0
        %611 = vmatprep.subr.mxu0 0.0
        %612 = vmatpush1.msra.mxu0 0.0
        %613 = vmatprep.subr.mxu0 0.0
        %614 = vmatpush1.msra.mxu0 0.0
        %615 = vmatprep.subr.mxu0 0.0
        %616 = vmatpush1.msra.mxu0 0.0
        %617 = vmatprep.subr.mxu0 0.0
        %618 = vmatpush1.msra.mxu0 %v492
        %619 = vmatprep.subr.mxu0 0.0
        %620 = vmatpush2.msra.mxu0 0.0
        %621 = vmatprep.subr.mxu0 0.0
        %622 = vmatpush2.msra.mxu0 0.0
        %623 = vmatprep.subr.mxu0 0.0
        %624 = vmatpush2.msra.mxu0 0.0
        %625 = vmatprep.subr.mxu0 0.0
        %626 = vmatpush2.msra.mxu0 0.0
        %627 = vmatprep.subr.mxu0 0.0
        %628 = vmatpush2.msra.mxu0 0.0
        %629 = vmatprep.subr.mxu0 0.0
        %630 = vmatpush2.msra.mxu0 0.0
        %631 = vmatprep.subr.mxu0 0.0
        %632 = vmatpush2.msra.mxu0 0.0
        %633 = vmatprep.subr.mxu0 0.0
        %634 = vmatpush2.msra.mxu0 0.0
        %635 = vmatprep.subr.mxu0 0.0
        %636 = vmatpush2.msra.mxu0 0.0
        %637 = vmatprep.subr.mxu0 0.0
        %638 = vmatpush2.msra.mxu0 0.0
        %639 = vmatprep.subr.mxu0 0.0
        %640 = vmatpush2.msra.mxu0 0.0
        %641 = vmatprep.subr.mxu0 0.0
        %642 = vmatpush2.msra.mxu0 0.0
        %643 = vmatprep.subr.mxu0 0.0
        %644 = vmatpush2.msra.mxu0 0.0
        %645 = vmatprep.subr.mxu0 0.0
        %646 = vmatpush2.msra.mxu0 0.0
        %647 = vmatprep.subr.mxu0 0.0
        %648 = vmatpush2.msra.mxu0 0.0
        %649 = vmatprep.subr.mxu0 0.0
        %650 = vmatpush2.msra.mxu0 0.0
        %651 = vmatprep.mubr.f32.mxu0 0.0
        %652 = vmatmul.mubr.f32.gmra.mxu0 %v585
        %v653 = vpop.f32.mrf.mxu0
        %v654 = vadd.f32 0.0, %v653
        %v655 = vpop.f32.mrf.mxu0
        %656 = vdwg.mxu0
        %v657 = vld [vmem:[%s5] sm:$0xff]
        %s658 = scalar_lea.vmem %s2, 32
        %v659 = vld [vmem:[%s658] sm:$0xff]
        %v660 = vld [vmem:[%s658 + $0x8] sm:$0xff]
        %v661 = vld [vmem:[%s658 + $0x10] sm:$0xff]
        %v662 = vld [vmem:[%s658 + $0x18] sm:$0xff]
        %663 = vmatprep.subr.mxu0 0.0
        %664 = vmatpush1.msra.mxu0 0.0
        %665 = vmatprep.subr.mxu0 0.0
        %666 = vmatpush1.msra.mxu0 0.0
        %667 = vmatprep.subr.mxu0 0.0
        %668 = vmatpush1.msra.mxu0 0.0
        %669 = vmatprep.subr.mxu0 0.0
        %670 = vmatpush1.msra.mxu0 0.0
        %671 = vmatprep.subr.mxu0 0.0
        %672 = vmatpush1.msra.mxu0 0.0
        %673 = vmatprep.subr.mxu0 0.0
        %674 = vmatpush1.msra.mxu0 0.0
        %675 = vmatprep.subr.mxu0 0.0
        %676 = vmatpush1.msra.mxu0 0.0
        %677 = vmatprep.subr.mxu0 0.0
        %678 = vmatpush1.msra.mxu0 0.0
        %679 = vmatprep.subr.mxu0 0.0
        %680 = vmatpush1.msra.mxu0 0.0
        %681 = vmatprep.subr.mxu0 0.0
        %682 = vmatpush1.msra.mxu0 0.0
        %683 = vmatprep.subr.mxu0 0.0
        %684 = vmatpush1.msra.mxu0 0.0
        %685 = vmatprep.subr.mxu0 0.0
        %686 = vmatpush1.msra.mxu0 0.0
        %687 = vmatprep.subr.mxu0 0.0
        %688 = vmatpush1.msra.mxu0 %v662
        %689 = vmatprep.subr.mxu0 0.0
        %690 = vmatpush1.msra.mxu0 %v661
        %691 = vmatprep.subr.mxu0 0.0
        %692 = vmatpush1.msra.mxu0 %v660
        %693 = vmatprep.subr.mxu0 0.0
        %694 = vmatpush1.msra.mxu0 %v659
        %695 = vmatprep.subr.mxu0 0.0
        %696 = vmatpush2.msra.mxu0 0.0
        %697 = vmatprep.subr.mxu0 0.0
        %698 = vmatpush2.msra.mxu0 0.0
        %699 = vmatprep.subr.mxu0 0.0
        %700 = vmatpush2.msra.mxu0 0.0
        %701 = vmatprep.subr.mxu0 0.0
        %702 = vmatpush2.msra.mxu0 0.0
        %703 = vmatprep.subr.mxu0 0.0
        %704 = vmatpush2.msra.mxu0 0.0
        %705 = vmatprep.subr.mxu0 0.0
        %706 = vmatpush2.msra.mxu0 0.0
        %707 = vmatprep.subr.mxu0 0.0
        %708 = vmatpush2.msra.mxu0 0.0
        %709 = vmatprep.subr.mxu0 0.0
        %710 = vmatpush2.msra.mxu0 0.0
        %711 = vmatprep.subr.mxu0 0.0
        %712 = vmatpush2.msra.mxu0 0.0
        %713 = vmatprep.subr.mxu0 0.0
        %714 = vmatpush2.msra.mxu0 0.0
        %715 = vmatprep.subr.mxu0 0.0
        %716 = vmatpush2.msra.mxu0 0.0
        %717 = vmatprep.subr.mxu0 0.0
        %718 = vmatpush2.msra.mxu0 0.0
        %719 = vmatprep.subr.mxu0 0.0
        %720 = vmatpush2.msra.mxu0 0.0
        %721 = vmatprep.subr.mxu0 0.0
        %722 = vmatpush2.msra.mxu0 0.0
        %723 = vmatprep.subr.mxu0 0.0
        %724 = vmatpush2.msra.mxu0 0.0
        %725 = vmatprep.subr.mxu0 0.0
        %726 = vmatpush2.msra.mxu0 0.0
        %727 = vmatprep.mubr.f32.mxu0 0.0
        %728 = vmatmul.mubr.f32.gmra.mxu0 %v272
        %v729 = vpop.f32.mrf.mxu0
        %v730 = vadd.f32 0.0, %v729
        %v731 = vpop.f32.mrf.mxu0
        %732 = vdwg.mxu0
        %s733 = scalar_lea.vmem %s3, 32
        %v734 = vld [vmem:[%s733] sm:$0xff]
        %v735 = vld [vmem:[%s733 + $0x8] sm:$0xff]
        %v736 = vld [vmem:[%s733 + $0x10] sm:$0xff]
        %v737 = vld [vmem:[%s733 + $0x18] sm:$0xff]
        %738 = vmatprep.subr.mxu0 0.0
        %739 = vmatpush1.msra.mxu0 0.0
        %740 = vmatprep.subr.mxu0 0.0
        %741 = vmatpush1.msra.mxu0 0.0
        %742 = vmatprep.subr.mxu0 0.0
        %743 = vmatpush1.msra.mxu0 0.0
        %744 = vmatprep.subr.mxu0 0.0
        %745 = vmatpush1.msra.mxu0 0.0
        %746 = vmatprep.subr.mxu0 0.0
        %747 = vmatpush1.msra.mxu0 0.0
        %748 = vmatprep.subr.mxu0 0.0
        %749 = vmatpush1.msra.mxu0 0.0
        %750 = vmatprep.subr.mxu0 0.0
        %751 = vmatpush1.msra.mxu0 0.0
        %752 = vmatprep.subr.mxu0 0.0
        %753 = vmatpush1.msra.mxu0 0.0
        %754 = vmatprep.subr.mxu0 0.0
        %755 = vmatpush1.msra.mxu0 0.0
        %756 = vmatprep.subr.mxu0 0.0
        %757 = vmatpush1.msra.mxu0 0.0
        %758 = vmatprep.subr.mxu0 0.0
        %759 = vmatpush1.msra.mxu0 0.0
        %760 = vmatprep.subr.mxu0 0.0
        %761 = vmatpush1.msra.mxu0 0.0
        %762 = vmatprep.subr.mxu0 0.0
        %763 = vmatpush1.msra.mxu0 %v737
        %764 = vmatprep.subr.mxu0 0.0
        %765 = vmatpush1.msra.mxu0 %v736
        %766 = vmatprep.subr.mxu0 0.0
        %767 = vmatpush1.msra.mxu0 %v735
        %768 = vmatprep.subr.mxu0 0.0
        %769 = vmatpush1.msra.mxu0 %v734
        %770 = vmatprep.subr.mxu0 0.0
        %771 = vmatpush2.msra.mxu0 0.0
        %772 = vmatprep.subr.mxu0 0.0
        %773 = vmatpush2.msra.mxu0 0.0
        %774 = vmatprep.subr.mxu0 0.0
        %775 = vmatpush2.msra.mxu0 0.0
        %776 = vmatprep.subr.mxu0 0.0
        %777 = vmatpush2.msra.mxu0 0.0
        %778 = vmatprep.subr.mxu0 0.0
        %779 = vmatpush2.msra.mxu0 0.0
        %780 = vmatprep.subr.mxu0 0.0
        %781 = vmatpush2.msra.mxu0 0.0
        %782 = vmatprep.subr.mxu0 0.0
        %783 = vmatpush2.msra.mxu0 0.0
        %784 = vmatprep.subr.mxu0 0.0
        %785 = vmatpush2.msra.mxu0 0.0
        %786 = vmatprep.subr.mxu0 0.0
        %787 = vmatpush2.msra.mxu0 0.0
        %788 = vmatprep.subr.mxu0 0.0
        %789 = vmatpush2.msra.mxu0 0.0
        %790 = vmatprep.subr.mxu0 0.0
        %791 = vmatpush2.msra.mxu0 0.0
        %792 = vmatprep.subr.mxu0 0.0
        %793 = vmatpush2.msra.mxu0 0.0
        %794 = vmatprep.subr.mxu0 0.0
        %795 = vmatpush2.msra.mxu0 0.0
        %796 = vmatprep.subr.mxu0 0.0
        %797 = vmatpush2.msra.mxu0 0.0
        %798 = vmatprep.subr.mxu0 0.0
        %799 = vmatpush2.msra.mxu0 0.0
        %800 = vmatprep.subr.mxu0 0.0
        %801 = vmatpush2.msra.mxu0 0.0
        %802 = vmatprep.mubr.f32.mxu0 0.0
        %803 = vmatmul.mubr.f32.gmra.mxu0 %v349
        %v804 = vpop.f32.mrf.mxu0
        %v805 = vadd.f32 0.0, %v804
        %v806 = vpop.f32.mrf.mxu0
        %807 = vdwg.mxu0
        %s808 = scalar_lea.vmem %s4, 32
        %v809 = vld [vmem:[%s808] sm:$0xff]
        %v810 = vld [vmem:[%s808 + $0x8] sm:$0xff]
        %v811 = vld [vmem:[%s808 + $0x10] sm:$0xff]
        %v812 = vld [vmem:[%s808 + $0x18] sm:$0xff]
        %813 = vmatprep.subr.mxu0 0.0
        %814 = vmatpush1.msra.mxu0 0.0
        %815 = vmatprep.subr.mxu0 0.0
        %816 = vmatpush1.msra.mxu0 0.0
        %817 = vmatprep.subr.mxu0 0.0
        %818 = vmatpush1.msra.mxu0 0.0
        %819 = vmatprep.subr.mxu0 0.0
        %820 = vmatpush1.msra.mxu0 0.0
        %821 = vmatprep.subr.mxu0 0.0
        %822 = vmatpush1.msra.mxu0 0.0
        %823 = vmatprep.subr.mxu0 0.0
        %824 = vmatpush1.msra.mxu0 0.0
        %825 = vmatprep.subr.mxu0 0.0
        %826 = vmatpush1.msra.mxu0 0.0
        %827 = vmatprep.subr.mxu0 0.0
        %828 = vmatpush1.msra.mxu0 0.0
        %829 = vmatprep.subr.mxu0 0.0
        %830 = vmatpush1.msra.mxu0 0.0
        %831 = vmatprep.subr.mxu0 0.0
        %832 = vmatpush1.msra.mxu0 0.0
        %833 = vmatprep.subr.mxu0 0.0
        %834 = vmatpush1.msra.mxu0 0.0
        %835 = vmatprep.subr.mxu0 0.0
        %836 = vmatpush1.msra.mxu0 0.0
        %837 = vmatprep.subr.mxu0 0.0
        %838 = vmatpush1.msra.mxu0 %v812
        %839 = vmatprep.subr.mxu0 0.0
        %840 = vmatpush1.msra.mxu0 %v811
        %841 = vmatprep.subr.mxu0 0.0
        %842 = vmatpush1.msra.mxu0 %v810
        %843 = vmatprep.subr.mxu0 0.0
        %844 = vmatpush1.msra.mxu0 %v809
        %845 = vmatprep.subr.mxu0 0.0
        %846 = vmatpush2.msra.mxu0 0.0
        %847 = vmatprep.subr.mxu0 0.0
        %848 = vmatpush2.msra.mxu0 0.0
        %849 = vmatprep.subr.mxu0 0.0
        %850 = vmatpush2.msra.mxu0 0.0
        %851 = vmatprep.subr.mxu0 0.0
        %852 = vmatpush2.msra.mxu0 0.0
        %853 = vmatprep.subr.mxu0 0.0
        %854 = vmatpush2.msra.mxu0 0.0
        %855 = vmatprep.subr.mxu0 0.0
        %856 = vmatpush2.msra.mxu0 0.0
        %857 = vmatprep.subr.mxu0 0.0
        %858 = vmatpush2.msra.mxu0 0.0
        %859 = vmatprep.subr.mxu0 0.0
        %860 = vmatpush2.msra.mxu0 0.0
        %861 = vmatprep.subr.mxu0 0.0
        %862 = vmatpush2.msra.mxu0 0.0
        %863 = vmatprep.subr.mxu0 0.0
        %864 = vmatpush2.msra.mxu0 0.0
        %865 = vmatprep.subr.mxu0 0.0
        %866 = vmatpush2.msra.mxu0 0.0
        %867 = vmatprep.subr.mxu0 0.0
        %868 = vmatpush2.msra.mxu0 0.0
        %869 = vmatprep.subr.mxu0 0.0
        %870 = vmatpush2.msra.mxu0 0.0
        %871 = vmatprep.subr.mxu0 0.0
        %872 = vmatpush2.msra.mxu0 0.0
        %873 = vmatprep.subr.mxu0 0.0
        %874 = vmatpush2.msra.mxu0 0.0
        %875 = vmatprep.subr.mxu0 0.0
        %876 = vmatpush2.msra.mxu0 0.0
        %877 = vmatprep.mubr.f32.mxu0 0.0
        %878 = vmatmul.mubr.f32.gmra.mxu0 %v349
        %v879 = vpop.f32.mrf.mxu0
        %v880 = vadd.f32 0.0, %v879
        %v881 = vpop.f32.mrf.mxu0
        %882 = vdwg.mxu0
        %v884 = vsel %vm495, %v730, 0
        %v887 = vsel %vm495, %v805, 0
        %889 = vmatprep.subr.mxu0 0.0
        %890 = vmatpush1.xpose.msra.mxu0 0.0
        %891 = vmatprep.subr.mxu0 0.0
        %892 = vmatpush1.xpose.msra.mxu0 0.0
        %893 = vmatprep.subr.mxu0 0.0
        %894 = vmatpush1.xpose.msra.mxu0 0.0
        %895 = vmatprep.subr.mxu0 0.0
        %896 = vmatpush1.xpose.msra.mxu0 0.0
        %897 = vmatprep.subr.mxu0 0.0
        %898 = vmatpush1.xpose.msra.mxu0 0.0
        %899 = vmatprep.subr.mxu0 0.0
        %900 = vmatpush1.xpose.msra.mxu0 0.0
        %901 = vmatprep.subr.mxu0 0.0
        %902 = vmatpush1.xpose.msra.mxu0 0.0
        %903 = vmatprep.subr.mxu0 0.0
        %904 = vmatpush1.xpose.msra.mxu0 0.0
        %905 = vmatprep.subr.mxu0 0.0
        %906 = vmatpush1.xpose.msra.mxu0 0.0
        %907 = vmatprep.subr.mxu0 0.0
        %908 = vmatpush1.xpose.msra.mxu0 0.0
        %909 = vmatprep.subr.mxu0 0.0
        %910 = vmatpush1.xpose.msra.mxu0 0.0
        %911 = vmatprep.subr.mxu0 0.0
        %912 = vmatpush1.xpose.msra.mxu0 0.0
        %913 = vmatprep.subr.mxu0 0.0
        %914 = vmatpush1.xpose.msra.mxu0 0.0
        %915 = vmatprep.subr.mxu0 0.0
        %916 = vmatpush1.xpose.msra.mxu0 0.0
        %917 = vmatprep.subr.mxu0 0.0
        %918 = vmatpush1.xpose.msra.mxu0 0.0
        %919 = vmatprep.subr.mxu0 0.0
        %920 = vmatpush1.xpose.msra.mxu0 %v887
        %921 = vmatprep.subr.mxu0 0.0
        %922 = vmatpush2.xpose.msra.mxu0 0.0
        %923 = vmatprep.subr.mxu0 0.0
        %924 = vmatpush2.xpose.msra.mxu0 0.0
        %925 = vmatprep.subr.mxu0 0.0
        %926 = vmatpush2.xpose.msra.mxu0 0.0
        %927 = vmatprep.subr.mxu0 0.0
        %928 = vmatpush2.xpose.msra.mxu0 0.0
        %929 = vmatprep.subr.mxu0 0.0
        %930 = vmatpush2.xpose.msra.mxu0 0.0
        %931 = vmatprep.subr.mxu0 0.0
        %932 = vmatpush2.xpose.msra.mxu0 0.0
        %933 = vmatprep.subr.mxu0 0.0
        %934 = vmatpush2.xpose.msra.mxu0 0.0
        %935 = vmatprep.subr.mxu0 0.0
        %936 = vmatpush2.xpose.msra.mxu0 0.0
        %937 = vmatprep.subr.mxu0 0.0
        %938 = vmatpush2.xpose.msra.mxu0 0.0
        %939 = vmatprep.subr.mxu0 0.0
        %940 = vmatpush2.xpose.msra.mxu0 0.0
        %941 = vmatprep.subr.mxu0 0.0
        %942 = vmatpush2.xpose.msra.mxu0 0.0
        %943 = vmatprep.subr.mxu0 0.0
        %944 = vmatpush2.xpose.msra.mxu0 0.0
        %945 = vmatprep.subr.mxu0 0.0
        %946 = vmatpush2.xpose.msra.mxu0 0.0
        %947 = vmatprep.subr.mxu0 0.0
        %948 = vmatpush2.xpose.msra.mxu0 0.0
        %949 = vmatprep.subr.mxu0 0.0
        %950 = vmatpush2.xpose.msra.mxu0 0.0
        %951 = vmatprep.subr.mxu0 0.0
        %952 = vmatpush2.xpose.msra.mxu0 0.0
        %953 = vmatprep.mubr.f32.mxu0 0.0
        %954 = vmatmul.mubr.f32.gmra.mxu0 %v884
        %v955 = vpop.f32.mrf.mxu0
        %v956 = vadd.f32 0.0, %v955
        %v957 = vpop.f32.mrf.mxu0
        %958 = vdwg.mxu0
        %v959 = vmul.f32 %v956, 0.35355338
        %v960 = vsel %vm495, %v959, -inf
        %961 = vmax.xlane.f32.xlu0 %v960
        %v962 = vpop.xlane.xlu0 %961
        %v963 = vsub.f32 %v959, %v962
        %v964 = vmul.f32 %v963, 1.442695
        %v965 = vpow.pop %v964
        %v966 = vsel %vm495, %v965, 0.0
        %967 = vadd.xlane.f32.xlu0 %v966
        %v968 = vpop.xlane.xlu0 %967
        %v969 = vrcp.pop %v968
        %v970 = vmul.f32 %v965, %v969
        %v972 = vsel %vm495, %v970, 0
        %974 = vmatprep.subr.mxu0 0.0
        %975 = vmatpush1.msra.mxu0 0.0
        %976 = vmatprep.subr.mxu0 0.0
        %977 = vmatpush1.msra.mxu0 0.0
        %978 = vmatprep.subr.mxu0 0.0
        %979 = vmatpush1.msra.mxu0 0.0
        %980 = vmatprep.subr.mxu0 0.0
        %981 = vmatpush1.msra.mxu0 0.0
        %982 = vmatprep.subr.mxu0 0.0
        %983 = vmatpush1.msra.mxu0 0.0
        %984 = vmatprep.subr.mxu0 0.0
        %985 = vmatpush1.msra.mxu0 0.0
        %986 = vmatprep.subr.mxu0 0.0
        %987 = vmatpush1.msra.mxu0 0.0
        %988 = vmatprep.subr.mxu0 0.0
        %989 = vmatpush1.msra.mxu0 0.0
        %990 = vmatprep.subr.mxu0 0.0
        %991 = vmatpush1.msra.mxu0 0.0
        %992 = vmatprep.subr.mxu0 0.0
        %993 = vmatpush1.msra.mxu0 0.0
        %994 = vmatprep.subr.mxu0 0.0
        %995 = vmatpush1.msra.mxu0 0.0
        %996 = vmatprep.subr.mxu0 0.0
        %997 = vmatpush1.msra.mxu0 0.0
        %998 = vmatprep.subr.mxu0 0.0
        %999 = vmatpush1.msra.mxu0 0.0
        %1000 = vmatprep.subr.mxu0 0.0
        %1001 = vmatpush1.msra.mxu0 0.0
        %1002 = vmatprep.subr.mxu0 0.0
        %1003 = vmatpush1.msra.mxu0 0.0
        %1004 = vmatprep.subr.mxu0 0.0
        %1005 = vmatpush1.msra.mxu0 %v880
        %1006 = vmatprep.subr.mxu0 0.0
        %1007 = vmatpush2.msra.mxu0 0.0
        %1008 = vmatprep.subr.mxu0 0.0
        %1009 = vmatpush2.msra.mxu0 0.0
        %1010 = vmatprep.subr.mxu0 0.0
        %1011 = vmatpush2.msra.mxu0 0.0
        %1012 = vmatprep.subr.mxu0 0.0
        %1013 = vmatpush2.msra.mxu0 0.0
        %1014 = vmatprep.subr.mxu0 0.0
        %1015 = vmatpush2.msra.mxu0 0.0
        %1016 = vmatprep.subr.mxu0 0.0
        %1017 = vmatpush2.msra.mxu0 0.0
        %1018 = vmatprep.subr.mxu0 0.0
        %1019 = vmatpush2.msra.mxu0 0.0
        %1020 = vmatprep.subr.mxu0 0.0
        %1021 = vmatpush2.msra.mxu0 0.0
        %1022 = vmatprep.subr.mxu0 0.0
        %1023 = vmatpush2.msra.mxu0 0.0
        %1024 = vmatprep.subr.mxu0 0.0
        %1025 = vmatpush2.msra.mxu0 0.0
        %1026 = vmatprep.subr.mxu0 0.0
        %1027 = vmatpush2.msra.mxu0 0.0
        %1028 = vmatprep.subr.mxu0 0.0
        %1029 = vmatpush2.msra.mxu0 0.0
        %1030 = vmatprep.subr.mxu0 0.0
        %1031 = vmatpush2.msra.mxu0 0.0
        %1032 = vmatprep.subr.mxu0 0.0
        %1033 = vmatpush2.msra.mxu0 0.0
        %1034 = vmatprep.subr.mxu0 0.0
        %1035 = vmatpush2.msra.mxu0 0.0
        %1036 = vmatprep.subr.mxu0 0.0
        %1037 = vmatpush2.msra.mxu0 0.0
        %1038 = vmatprep.mubr.f32.mxu0 0.0
        %1039 = vmatmul.mubr.f32.gmra.mxu0 %v972
        %v1040 = vpop.f32.mrf.mxu0
        %v1041 = vadd.f32 0.0, %v1040
        %v1042 = vpop.f32.mrf.mxu0
        %1043 = vdwg.mxu0
        %s1044 = scalar_lea.vmem %s5, 8
        %v1045 = vld [vmem:[%s1044] sm:$0xff]
        %v1047 = vsel %vm495, %v1041, 0
        %1049 = vmatprep.subr.mxu0 0.0
        %1050 = vmatpush1.msra.mxu0 0.0
        %1051 = vmatprep.subr.mxu0 0.0
        %1052 = vmatpush1.msra.mxu0 0.0
        %1053 = vmatprep.subr.mxu0 0.0
        %1054 = vmatpush1.msra.mxu0 0.0
        %1055 = vmatprep.subr.mxu0 0.0
        %1056 = vmatpush1.msra.mxu0 0.0
        %1057 = vmatprep.subr.mxu0 0.0
        %1058 = vmatpush1.msra.mxu0 0.0
        %1059 = vmatprep.subr.mxu0 0.0
        %1060 = vmatpush1.msra.mxu0 0.0
        %1061 = vmatprep.subr.mxu0 0.0
        %1062 = vmatpush1.msra.mxu0 0.0
        %1063 = vmatprep.subr.mxu0 0.0
        %1064 = vmatpush1.msra.mxu0 0.0
        %1065 = vmatprep.subr.mxu0 0.0
        %1066 = vmatpush1.msra.mxu0 0.0
        %1067 = vmatprep.subr.mxu0 0.0
        %1068 = vmatpush1.msra.mxu0 0.0
        %1069 = vmatprep.subr.mxu0 0.0
        %1070 = vmatpush1.msra.mxu0 0.0
        %1071 = vmatprep.subr.mxu0 0.0
        %1072 = vmatpush1.msra.mxu0 0.0
        %1073 = vmatprep.subr.mxu0 0.0
        %1074 = vmatpush1.msra.mxu0 0.0
        %1075 = vmatprep.subr.mxu0 0.0
        %1076 = vmatpush1.msra.mxu0 0.0
        %1077 = vmatprep.subr.mxu0 0.0
        %1078 = vmatpush1.msra.mxu0 0.0
        %1079 = vmatprep.subr.mxu0 0.0
        %1080 = vmatpush1.msra.mxu0 %v1045
        %1081 = vmatprep.subr.mxu0 0.0
        %1082 = vmatpush2.msra.mxu0 0.0
        %1083 = vmatprep.subr.mxu0 0.0
        %1084 = vmatpush2.msra.mxu0 0.0
        %1085 = vmatprep.subr.mxu0 0.0
        %1086 = vmatpush2.msra.mxu0 0.0
        %1087 = vmatprep.subr.mxu0 0.0
        %1088 = vmatpush2.msra.mxu0 0.0
        %1089 = vmatprep.subr.mxu0 0.0
        %1090 = vmatpush2.msra.mxu0 0.0
        %1091 = vmatprep.subr.mxu0 0.0
        %1092 = vmatpush2.msra.mxu0 0.0
        %1093 = vmatprep.subr.mxu0 0.0
        %1094 = vmatpush2.msra.mxu0 0.0
        %1095 = vmatprep.subr.mxu0 0.0
        %1096 = vmatpush2.msra.mxu0 0.0
        %1097 = vmatprep.subr.mxu0 0.0
        %1098 = vmatpush2.msra.mxu0 0.0
        %1099 = vmatprep.subr.mxu0 0.0
        %1100 = vmatpush2.msra.mxu0 0.0
        %1101 = vmatprep.subr.mxu0 0.0
        %1102 = vmatpush2.msra.mxu0 0.0
        %1103 = vmatprep.subr.mxu0 0.0
        %1104 = vmatpush2.msra.mxu0 0.0
        %1105 = vmatprep.subr.mxu0 0.0
        %1106 = vmatpush2.msra.mxu0 0.0
        %1107 = vmatprep.subr.mxu0 0.0
        %1108 = vmatpush2.msra.mxu0 0.0
        %1109 = vmatprep.subr.mxu0 0.0
        %1110 = vmatpush2.msra.mxu0 0.0
        %1111 = vmatprep.subr.mxu0 0.0
        %1112 = vmatpush2.msra.mxu0 0.0
        %1113 = vmatprep.mubr.f32.mxu0 0.0
        %1114 = vmatmul.mubr.f32.gmra.mxu0 %v1047
        %v1115 = vpop.f32.mrf.mxu0
        %v1116 = vadd.f32 0.0, %v1115
        %v1117 = vpop.f32.mrf.mxu0
        %1118 = vdwg.mxu0
        %v1120 = vsel %vm495, %v654, 0
        %1122 = vmatprep.subr.mxu0 0.0
        %1123 = vmatpush1.msra.mxu0 0.0
        %1124 = vmatprep.subr.mxu0 0.0
        %1125 = vmatpush1.msra.mxu0 0.0
        %1126 = vmatprep.subr.mxu0 0.0
        %1127 = vmatpush1.msra.mxu0 0.0
        %1128 = vmatprep.subr.mxu0 0.0
        %1129 = vmatpush1.msra.mxu0 0.0
        %1130 = vmatprep.subr.mxu0 0.0
        %1131 = vmatpush1.msra.mxu0 0.0
        %1132 = vmatprep.subr.mxu0 0.0
        %1133 = vmatpush1.msra.mxu0 0.0
        %1134 = vmatprep.subr.mxu0 0.0
        %1135 = vmatpush1.msra.mxu0 0.0
        %1136 = vmatprep.subr.mxu0 0.0
        %1137 = vmatpush1.msra.mxu0 0.0
        %1138 = vmatprep.subr.mxu0 0.0
        %1139 = vmatpush1.msra.mxu0 0.0
        %1140 = vmatprep.subr.mxu0 0.0
        %1141 = vmatpush1.msra.mxu0 0.0
        %1142 = vmatprep.subr.mxu0 0.0
        %1143 = vmatpush1.msra.mxu0 0.0
        %1144 = vmatprep.subr.mxu0 0.0
        %1145 = vmatpush1.msra.mxu0 0.0
        %1146 = vmatprep.subr.mxu0 0.0
        %1147 = vmatpush1.msra.mxu0 0.0
        %1148 = vmatprep.subr.mxu0 0.0
        %1149 = vmatpush1.msra.mxu0 0.0
        %1150 = vmatprep.subr.mxu0 0.0
        %1151 = vmatpush1.msra.mxu0 0.0
        %1152 = vmatprep.subr.mxu0 0.0
        %1153 = vmatpush1.msra.mxu0 %v657
        %1154 = vmatprep.subr.mxu0 0.0
        %1155 = vmatpush2.msra.mxu0 0.0
        %1156 = vmatprep.subr.mxu0 0.0
        %1157 = vmatpush2.msra.mxu0 0.0
        %1158 = vmatprep.subr.mxu0 0.0
        %1159 = vmatpush2.msra.mxu0 0.0
        %1160 = vmatprep.subr.mxu0 0.0
        %1161 = vmatpush2.msra.mxu0 0.0
        %1162 = vmatprep.subr.mxu0 0.0
        %1163 = vmatpush2.msra.mxu0 0.0
        %1164 = vmatprep.subr.mxu0 0.0
        %1165 = vmatpush2.msra.mxu0 0.0
        %1166 = vmatprep.subr.mxu0 0.0
        %1167 = vmatpush2.msra.mxu0 0.0
        %1168 = vmatprep.subr.mxu0 0.0
        %1169 = vmatpush2.msra.mxu0 0.0
        %1170 = vmatprep.subr.mxu0 0.0
        %1171 = vmatpush2.msra.mxu0 0.0
        %1172 = vmatprep.subr.mxu0 0.0
        %1173 = vmatpush2.msra.mxu0 0.0
        %1174 = vmatprep.subr.mxu0 0.0
        %1175 = vmatpush2.msra.mxu0 0.0
        %1176 = vmatprep.subr.mxu0 0.0
        %1177 = vmatpush2.msra.mxu0 0.0
        %1178 = vmatprep.subr.mxu0 0.0
        %1179 = vmatpush2.msra.mxu0 0.0
        %1180 = vmatprep.subr.mxu0 0.0
        %1181 = vmatpush2.msra.mxu0 0.0
        %1182 = vmatprep.subr.mxu0 0.0
        %1183 = vmatpush2.msra.mxu0 0.0
        %1184 = vmatprep.subr.mxu0 0.0
        %1185 = vmatpush2.msra.mxu0 0.0
        %1186 = vmatprep.mubr.f32.mxu0 0.0
        %1187 = vmatmul.mubr.f32.gmra.mxu0 %v1120
        %v1188 = vpop.f32.mrf.mxu0
        %v1189 = vadd.f32 %v1116, %v1188
        %v1190 = vpop.f32.mrf.mxu0
        %1191 = vdwg.mxu0
        %s1192 = scalar_lea.vmem %s2, 64
        %v1193 = vld [vmem:[%s1192] sm:$0xff]
        %v1194 = vld [vmem:[%s1192 + $0x8] sm:$0xff]
        %v1195 = vld [vmem:[%s1192 + $0x10] sm:$0xff]
        %v1196 = vld [vmem:[%s1192 + $0x18] sm:$0xff]
        %1197 = vmatprep.subr.mxu0 0.0
        %1198 = vmatpush1.msra.mxu0 0.0
        %1199 = vmatprep.subr.mxu0 0.0
        %1200 = vmatpush1.msra.mxu0 0.0
        %1201 = vmatprep.subr.mxu0 0.0
        %1202 = vmatpush1.msra.mxu0 0.0
        %1203 = vmatprep.subr.mxu0 0.0
        %1204 = vmatpush1.msra.mxu0 0.0
        %1205 = vmatprep.subr.mxu0 0.0
        %1206 = vmatpush1.msra.mxu0 0.0
        %1207 = vmatprep.subr.mxu0 0.0
        %1208 = vmatpush1.msra.mxu0 0.0
        %1209 = vmatprep.subr.mxu0 0.0
        %1210 = vmatpush1.msra.mxu0 0.0
        %1211 = vmatprep.subr.mxu0 0.0
        %1212 = vmatpush1.msra.mxu0 0.0
        %1213 = vmatprep.subr.mxu0 0.0
        %1214 = vmatpush1.msra.mxu0 0.0
        %1215 = vmatprep.subr.mxu0 0.0
        %1216 = vmatpush1.msra.mxu0 0.0
        %1217 = vmatprep.subr.mxu0 0.0
        %1218 = vmatpush1.msra.mxu0 0.0
        %1219 = vmatprep.subr.mxu0 0.0
        %1220 = vmatpush1.msra.mxu0 0.0
        %1221 = vmatprep.subr.mxu0 0.0
        %1222 = vmatpush1.msra.mxu0 %v1196
        %1223 = vmatprep.subr.mxu0 0.0
        %1224 = vmatpush1.msra.mxu0 %v1195
        %1225 = vmatprep.subr.mxu0 0.0
        %1226 = vmatpush1.msra.mxu0 %v1194
        %1227 = vmatprep.subr.mxu0 0.0
        %1228 = vmatpush1.msra.mxu0 %v1193
        %1229 = vmatprep.subr.mxu0 0.0
        %1230 = vmatpush2.msra.mxu0 0.0
        %1231 = vmatprep.subr.mxu0 0.0
        %1232 = vmatpush2.msra.mxu0 0.0
        %1233 = vmatprep.subr.mxu0 0.0
        %1234 = vmatpush2.msra.mxu0 0.0
        %1235 = vmatprep.subr.mxu0 0.0
        %1236 = vmatpush2.msra.mxu0 0.0
        %1237 = vmatprep.subr.mxu0 0.0
        %1238 = vmatpush2.msra.mxu0 0.0
        %1239 = vmatprep.subr.mxu0 0.0
        %1240 = vmatpush2.msra.mxu0 0.0
        %1241 = vmatprep.subr.mxu0 0.0
        %1242 = vmatpush2.msra.mxu0 0.0
        %1243 = vmatprep.subr.mxu0 0.0
        %1244 = vmatpush2.msra.mxu0 0.0
        %1245 = vmatprep.subr.mxu0 0.0
        %1246 = vmatpush2.msra.mxu0 0.0
        %1247 = vmatprep.subr.mxu0 0.0
        %1248 = vmatpush2.msra.mxu0 0.0
        %1249 = vmatprep.subr.mxu0 0.0
        %1250 = vmatpush2.msra.mxu0 0.0
        %1251 = vmatprep.subr.mxu0 0.0
        %1252 = vmatpush2.msra.mxu0 0.0
        %1253 = vmatprep.subr.mxu0 0.0
        %1254 = vmatpush2.msra.mxu0 0.0
        %1255 = vmatprep.subr.mxu0 0.0
        %1256 = vmatpush2.msra.mxu0 0.0
        %1257 = vmatprep.subr.mxu0 0.0
        %1258 = vmatpush2.msra.mxu0 0.0
        %1259 = vmatprep.subr.mxu0 0.0
        %1260 = vmatpush2.msra.mxu0 0.0
        %1261 = vmatprep.mubr.f32.mxu0 0.0
        %1262 = vmatmul.mubr.f32.gmra.mxu0 %v272
        %v1263 = vpop.f32.mrf.mxu0
        %v1264 = vadd.f32 0.0, %v1263
        %v1265 = vpop.f32.mrf.mxu0
        %1266 = vdwg.mxu0
        %s1267 = scalar_lea.vmem %s3, 64
        %v1268 = vld [vmem:[%s1267] sm:$0xff]
        %v1269 = vld [vmem:[%s1267 + $0x8] sm:$0xff]
        %v1270 = vld [vmem:[%s1267 + $0x10] sm:$0xff]
        %v1271 = vld [vmem:[%s1267 + $0x18] sm:$0xff]
        %1272 = vmatprep.subr.mxu0 0.0
        %1273 = vmatpush1.msra.mxu0 0.0
        %1274 = vmatprep.subr.mxu0 0.0
        %1275 = vmatpush1.msra.mxu0 0.0
        %1276 = vmatprep.subr.mxu0 0.0
        %1277 = vmatpush1.msra.mxu0 0.0
        %1278 = vmatprep.subr.mxu0 0.0
        %1279 = vmatpush1.msra.mxu0 0.0
        %1280 = vmatprep.subr.mxu0 0.0
        %1281 = vmatpush1.msra.mxu0 0.0
        %1282 = vmatprep.subr.mxu0 0.0
        %1283 = vmatpush1.msra.mxu0 0.0
        %1284 = vmatprep.subr.mxu0 0.0
        %1285 = vmatpush1.msra.mxu0 0.0
        %1286 = vmatprep.subr.mxu0 0.0
        %1287 = vmatpush1.msra.mxu0 0.0
        %1288 = vmatprep.subr.mxu0 0.0
        %1289 = vmatpush1.msra.mxu0 0.0
        %1290 = vmatprep.subr.mxu0 0.0
        %1291 = vmatpush1.msra.mxu0 0.0
        %1292 = vmatprep.subr.mxu0 0.0
        %1293 = vmatpush1.msra.mxu0 0.0
        %1294 = vmatprep.subr.mxu0 0.0
        %1295 = vmatpush1.msra.mxu0 0.0
        %1296 = vmatprep.subr.mxu0 0.0
        %1297 = vmatpush1.msra.mxu0 %v1271
        %1298 = vmatprep.subr.mxu0 0.0
        %1299 = vmatpush1.msra.mxu0 %v1270
        %1300 = vmatprep.subr.mxu0 0.0
        %1301 = vmatpush1.msra.mxu0 %v1269
        %1302 = vmatprep.subr.mxu0 0.0
        %1303 = vmatpush1.msra.mxu0 %v1268
        %1304 = vmatprep.subr.mxu0 0.0
        %1305 = vmatpush2.msra.mxu0 0.0
        %1306 = vmatprep.subr.mxu0 0.0
        %1307 = vmatpush2.msra.mxu0 0.0
        %1308 = vmatprep.subr.mxu0 0.0
        %1309 = vmatpush2.msra.mxu0 0.0
        %1310 = vmatprep.subr.mxu0 0.0
        %1311 = vmatpush2.msra.mxu0 0.0
        %1312 = vmatprep.subr.mxu0 0.0
        %1313 = vmatpush2.msra.mxu0 0.0
        %1314 = vmatprep.subr.mxu0 0.0
        %1315 = vmatpush2.msra.mxu0 0.0
        %1316 = vmatprep.subr.mxu0 0.0
        %1317 = vmatpush2.msra.mxu0 0.0
        %1318 = vmatprep.subr.mxu0 0.0
        %1319 = vmatpush2.msra.mxu0 0.0
        %1320 = vmatprep.subr.mxu0 0.0
        %1321 = vmatpush2.msra.mxu0 0.0
        %1322 = vmatprep.subr.mxu0 0.0
        %1323 = vmatpush2.msra.mxu0 0.0
        %1324 = vmatprep.subr.mxu0 0.0
        %1325 = vmatpush2.msra.mxu0 0.0
        %1326 = vmatprep.subr.mxu0 0.0
        %1327 = vmatpush2.msra.mxu0 0.0
        %1328 = vmatprep.subr.mxu0 0.0
        %1329 = vmatpush2.msra.mxu0 0.0
        %1330 = vmatprep.subr.mxu0 0.0
        %1331 = vmatpush2.msra.mxu0 0.0
        %1332 = vmatprep.subr.mxu0 0.0
        %1333 = vmatpush2.msra.mxu0 0.0
        %1334 = vmatprep.subr.mxu0 0.0
        %1335 = vmatpush2.msra.mxu0 0.0
        %1336 = vmatprep.mubr.f32.mxu0 0.0
        %1337 = vmatmul.mubr.f32.gmra.mxu0 %v349
        %v1338 = vpop.f32.mrf.mxu0
        %v1339 = vadd.f32 0.0, %v1338
        %v1340 = vpop.f32.mrf.mxu0
        %1341 = vdwg.mxu0
        %s1342 = scalar_lea.vmem %s4, 64
        %v1343 = vld [vmem:[%s1342] sm:$0xff]
        %v1344 = vld [vmem:[%s1342 + $0x8] sm:$0xff]
        %v1345 = vld [vmem:[%s1342 + $0x10] sm:$0xff]
        %v1346 = vld [vmem:[%s1342 + $0x18] sm:$0xff]
        %1347 = vmatprep.subr.mxu0 0.0
        %1348 = vmatpush1.msra.mxu0 0.0
        %1349 = vmatprep.subr.mxu0 0.0
        %1350 = vmatpush1.msra.mxu0 0.0
        %1351 = vmatprep.subr.mxu0 0.0
        %1352 = vmatpush1.msra.mxu0 0.0
        %1353 = vmatprep.subr.mxu0 0.0
        %1354 = vmatpush1.msra.mxu0 0.0
        %1355 = vmatprep.subr.mxu0 0.0
        %1356 = vmatpush1.msra.mxu0 0.0
        %1357 = vmatprep.subr.mxu0 0.0
        %1358 = vmatpush1.msra.mxu0 0.0
        %1359 = vmatprep.subr.mxu0 0.0
        %1360 = vmatpush1.msra.mxu0 0.0
        %1361 = vmatprep.subr.mxu0 0.0
        %1362 = vmatpush1.msra.mxu0 0.0
        %1363 = vmatprep.subr.mxu0 0.0
        %1364 = vmatpush1.msra.mxu0 0.0
        %1365 = vmatprep.subr.mxu0 0.0
        %1366 = vmatpush1.msra.mxu0 0.0
        %1367 = vmatprep.subr.mxu0 0.0
        %1368 = vmatpush1.msra.mxu0 0.0
        %1369 = vmatprep.subr.mxu0 0.0
        %1370 = vmatpush1.msra.mxu0 0.0
        %1371 = vmatprep.subr.mxu0 0.0
        %1372 = vmatpush1.msra.mxu0 %v1346
        %1373 = vmatprep.subr.mxu0 0.0
        %1374 = vmatpush1.msra.mxu0 %v1345
        %1375 = vmatprep.subr.mxu0 0.0
        %1376 = vmatpush1.msra.mxu0 %v1344
        %1377 = vmatprep.subr.mxu0 0.0
        %1378 = vmatpush1.msra.mxu0 %v1343
        %1379 = vmatprep.subr.mxu0 0.0
        %1380 = vmatpush2.msra.mxu0 0.0
        %1381 = vmatprep.subr.mxu0 0.0
        %1382 = vmatpush2.msra.mxu0 0.0
        %1383 = vmatprep.subr.mxu0 0.0
        %1384 = vmatpush2.msra.mxu0 0.0
        %1385 = vmatprep.subr.mxu0 0.0
        %1386 = vmatpush2.msra.mxu0 0.0
        %1387 = vmatprep.subr.mxu0 0.0
        %1388 = vmatpush2.msra.mxu0 0.0
        %1389 = vmatprep.subr.mxu0 0.0
        %1390 = vmatpush2.msra.mxu0 0.0
        %1391 = vmatprep.subr.mxu0 0.0
        %1392 = vmatpush2.msra.mxu0 0.0
        %1393 = vmatprep.subr.mxu0 0.0
        %1394 = vmatpush2.msra.mxu0 0.0
        %1395 = vmatprep.subr.mxu0 0.0
        %1396 = vmatpush2.msra.mxu0 0.0
        %1397 = vmatprep.subr.mxu0 0.0
        %1398 = vmatpush2.msra.mxu0 0.0
        %1399 = vmatprep.subr.mxu0 0.0
        %1400 = vmatpush2.msra.mxu0 0.0
        %1401 = vmatprep.subr.mxu0 0.0
        %1402 = vmatpush2.msra.mxu0 0.0
        %1403 = vmatprep.subr.mxu0 0.0
        %1404 = vmatpush2.msra.mxu0 0.0
        %1405 = vmatprep.subr.mxu0 0.0
        %1406 = vmatpush2.msra.mxu0 0.0
        %1407 = vmatprep.subr.mxu0 0.0
        %1408 = vmatpush2.msra.mxu0 0.0
        %1409 = vmatprep.subr.mxu0 0.0
        %1410 = vmatpush2.msra.mxu0 0.0
        %1411 = vmatprep.mubr.f32.mxu0 0.0
        %1412 = vmatmul.mubr.f32.gmra.mxu0 %v349
        %v1413 = vpop.f32.mrf.mxu0
        %v1414 = vadd.f32 0.0, %v1413
        %v1415 = vpop.f32.mrf.mxu0
        %1416 = vdwg.mxu0
        %v1418 = vsel %vm495, %v1264, 0
        %v1421 = vsel %vm495, %v1339, 0
        %1423 = vmatprep.subr.mxu0 0.0
        %1424 = vmatpush1.xpose.msra.mxu0 0.0
        %1425 = vmatprep.subr.mxu0 0.0
        %1426 = vmatpush1.xpose.msra.mxu0 0.0
        %1427 = vmatprep.subr.mxu0 0.0
        %1428 = vmatpush1.xpose.msra.mxu0 0.0
        %1429 = vmatprep.subr.mxu0 0.0
        %1430 = vmatpush1.xpose.msra.mxu0 0.0
        %1431 = vmatprep.subr.mxu0 0.0
        %1432 = vmatpush1.xpose.msra.mxu0 0.0
        %1433 = vmatprep.subr.mxu0 0.0
        %1434 = vmatpush1.xpose.msra.mxu0 0.0
        %1435 = vmatprep.subr.mxu0 0.0
        %1436 = vmatpush1.xpose.msra.mxu0 0.0
        %1437 = vmatprep.subr.mxu0 0.0
        %1438 = vmatpush1.xpose.msra.mxu0 0.0
        %1439 = vmatprep.subr.mxu0 0.0
        %1440 = vmatpush1.xpose.msra.mxu0 0.0
        %1441 = vmatprep.subr.mxu0 0.0
        %1442 = vmatpush1.xpose.msra.mxu0 0.0
        %1443 = vmatprep.subr.mxu0 0.0
        %1444 = vmatpush1.xpose.msra.mxu0 0.0
        %1445 = vmatprep.subr.mxu0 0.0
        %1446 = vmatpush1.xpose.msra.mxu0 0.0
        %1447 = vmatprep.subr.mxu0 0.0
        %1448 = vmatpush1.xpose.msra.mxu0 0.0
        %1449 = vmatprep.subr.mxu0 0.0
        %1450 = vmatpush1.xpose.msra.mxu0 0.0
        %1451 = vmatprep.subr.mxu0 0.0
        %1452 = vmatpush1.xpose.msra.mxu0 0.0
        %1453 = vmatprep.subr.mxu0 0.0
        %1454 = vmatpush1.xpose.msra.mxu0 %v1421
        %1455 = vmatprep.subr.mxu0 0.0
        %1456 = vmatpush2.xpose.msra.mxu0 0.0
        %1457 = vmatprep.subr.mxu0 0.0
        %1458 = vmatpush2.xpose.msra.mxu0 0.0
        %1459 = vmatprep.subr.mxu0 0.0
        %1460 = vmatpush2.xpose.msra.mxu0 0.0
        %1461 = vmatprep.subr.mxu0 0.0
        %1462 = vmatpush2.xpose.msra.mxu0 0.0
        %1463 = vmatprep.subr.mxu0 0.0
        %1464 = vmatpush2.xpose.msra.mxu0 0.0
        %1465 = vmatprep.subr.mxu0 0.0
        %1466 = vmatpush2.xpose.msra.mxu0 0.0
        %1467 = vmatprep.subr.mxu0 0.0
        %1468 = vmatpush2.xpose.msra.mxu0 0.0
        %1469 = vmatprep.subr.mxu0 0.0
        %1470 = vmatpush2.xpose.msra.mxu0 0.0
        %1471 = vmatprep.subr.mxu0 0.0
        %1472 = vmatpush2.xpose.msra.mxu0 0.0
        %1473 = vmatprep.subr.mxu0 0.0
        %1474 = vmatpush2.xpose.msra.mxu0 0.0
        %1475 = vmatprep.subr.mxu0 0.0
        %1476 = vmatpush2.xpose.msra.mxu0 0.0
        %1477 = vmatprep.subr.mxu0 0.0
        %1478 = vmatpush2.xpose.msra.mxu0 0.0
        %1479 = vmatprep.subr.mxu0 0.0
        %1480 = vmatpush2.xpose.msra.mxu0 0.0
        %1481 = vmatprep.subr.mxu0 0.0
        %1482 = vmatpush2.xpose.msra.mxu0 0.0
        %1483 = vmatprep.subr.mxu0 0.0
        %1484 = vmatpush2.xpose.msra.mxu0 0.0
        %1485 = vmatprep.subr.mxu0 0.0
        %1486 = vmatpush2.xpose.msra.mxu0 0.0
        %1487 = vmatprep.mubr.f32.mxu0 0.0
        %1488 = vmatmul.mubr.f32.gmra.mxu0 %v1418
        %v1489 = vpop.f32.mrf.mxu0
        %v1490 = vadd.f32 0.0, %v1489
        %v1491 = vpop.f32.mrf.mxu0
        %1492 = vdwg.mxu0
        %v1493 = vmul.f32 %v1490, 0.35355338
        %v1494 = vsel %vm495, %v1493, -inf
        %1495 = vmax.xlane.f32.xlu0 %v1494
        %v1496 = vpop.xlane.xlu0 %1495
        %v1497 = vsub.f32 %v1493, %v1496
        %v1498 = vmul.f32 %v1497, 1.442695
        %v1499 = vpow.pop %v1498
        %v1500 = vsel %vm495, %v1499, 0.0
        %1501 = vadd.xlane.f32.xlu0 %v1500
        %v1502 = vpop.xlane.xlu0 %1501
        %v1503 = vrcp.pop %v1502
        %v1504 = vmul.f32 %v1499, %v1503
        %v1506 = vsel %vm495, %v1504, 0
        %1508 = vmatprep.subr.mxu0 0.0
        %1509 = vmatpush1.msra.mxu0 0.0
        %1510 = vmatprep.subr.mxu0 0.0
        %1511 = vmatpush1.msra.mxu0 0.0
        %1512 = vmatprep.subr.mxu0 0.0
        %1513 = vmatpush1.msra.mxu0 0.0
        %1514 = vmatprep.subr.mxu0 0.0
        %1515 = vmatpush1.msra.mxu0 0.0
        %1516 = vmatprep.subr.mxu0 0.0
        %1517 = vmatpush1.msra.mxu0 0.0
        %1518 = vmatprep.subr.mxu0 0.0
        %1519 = vmatpush1.msra.mxu0 0.0
        %1520 = vmatprep.subr.mxu0 0.0
        %1521 = vmatpush1.msra.mxu0 0.0
        %1522 = vmatprep.subr.mxu0 0.0
        %1523 = vmatpush1.msra.mxu0 0.0
        %1524 = vmatprep.subr.mxu0 0.0
        %1525 = vmatpush1.msra.mxu0 0.0
        %1526 = vmatprep.subr.mxu0 0.0
        %1527 = vmatpush1.msra.mxu0 0.0
        %1528 = vmatprep.subr.mxu0 0.0
        %1529 = vmatpush1.msra.mxu0 0.0
        %1530 = vmatprep.subr.mxu0 0.0
        %1531 = vmatpush1.msra.mxu0 0.0
        %1532 = vmatprep.subr.mxu0 0.0
        %1533 = vmatpush1.msra.mxu0 0.0
        %1534 = vmatprep.subr.mxu0 0.0
        %1535 = vmatpush1.msra.mxu0 0.0
        %1536 = vmatprep.subr.mxu0 0.0
        %1537 = vmatpush1.msra.mxu0 0.0
        %1538 = vmatprep.subr.mxu0 0.0
        %1539 = vmatpush1.msra.mxu0 %v1414
        %1540 = vmatprep.subr.mxu0 0.0
        %1541 = vmatpush2.msra.mxu0 0.0
        %1542 = vmatprep.subr.mxu0 0.0
        %1543 = vmatpush2.msra.mxu0 0.0
        %1544 = vmatprep.subr.mxu0 0.0
        %1545 = vmatpush2.msra.mxu0 0.0
        %1546 = vmatprep.subr.mxu0 0.0
        %1547 = vmatpush2.msra.mxu0 0.0
        %1548 = vmatprep.subr.mxu0 0.0
        %1549 = vmatpush2.msra.mxu0 0.0
        %1550 = vmatprep.subr.mxu0 0.0
        %1551 = vmatpush2.msra.mxu0 0.0
        %1552 = vmatprep.subr.mxu0 0.0
        %1553 = vmatpush2.msra.mxu0 0.0
        %1554 = vmatprep.subr.mxu0 0.0
        %1555 = vmatpush2.msra.mxu0 0.0
        %1556 = vmatprep.subr.mxu0 0.0
        %1557 = vmatpush2.msra.mxu0 0.0
        %1558 = vmatprep.subr.mxu0 0.0
        %1559 = vmatpush2.msra.mxu0 0.0
        %1560 = vmatprep.subr.mxu0 0.0
        %1561 = vmatpush2.msra.mxu0 0.0
        %1562 = vmatprep.subr.mxu0 0.0
        %1563 = vmatpush2.msra.mxu0 0.0
        %1564 = vmatprep.subr.mxu0 0.0
        %1565 = vmatpush2.msra.mxu0 0.0
        %1566 = vmatprep.subr.mxu0 0.0
        %1567 = vmatpush2.msra.mxu0 0.0
        %1568 = vmatprep.subr.mxu0 0.0
        %1569 = vmatpush2.msra.mxu0 0.0
        %1570 = vmatprep.subr.mxu0 0.0
        %1571 = vmatpush2.msra.mxu0 0.0
        %1572 = vmatprep.mubr.f32.mxu0 0.0
        %1573 = vmatmul.mubr.f32.gmra.mxu0 %v1506
        %v1574 = vpop.f32.mrf.mxu0
        %v1575 = vadd.f32 0.0, %v1574
        %v1576 = vpop.f32.mrf.mxu0
        %1577 = vdwg.mxu0
        %s1578 = scalar_lea.vmem %s5, 16
        %v1579 = vld [vmem:[%s1578] sm:$0xff]
        %v1581 = vsel %vm495, %v1575, 0
        %1583 = vmatprep.subr.mxu0 0.0
        %1584 = vmatpush1.msra.mxu0 0.0
        %1585 = vmatprep.subr.mxu0 0.0
        %1586 = vmatpush1.msra.mxu0 0.0
        %1587 = vmatprep.subr.mxu0 0.0
        %1588 = vmatpush1.msra.mxu0 0.0
        %1589 = vmatprep.subr.mxu0 0.0
        %1590 = vmatpush1.msra.mxu0 0.0
        %1591 = vmatprep.subr.mxu0 0.0
        %1592 = vmatpush1.msra.mxu0 0.0
        %1593 = vmatprep.subr.mxu0 0.0
        %1594 = vmatpush1.msra.mxu0 0.0
        %1595 = vmatprep.subr.mxu0 0.0
        %1596 = vmatpush1.msra.mxu0 0.0
        %1597 = vmatprep.subr.mxu0 0.0
        %1598 = vmatpush1.msra.mxu0 0.0
        %1599 = vmatprep.subr.mxu0 0.0
        %1600 = vmatpush1.msra.mxu0 0.0
        %1601 = vmatprep.subr.mxu0 0.0
        %1602 = vmatpush1.msra.mxu0 0.0
        %1603 = vmatprep.subr.mxu0 0.0
        %1604 = vmatpush1.msra.mxu0 0.0
        %1605 = vmatprep.subr.mxu0 0.0
        %1606 = vmatpush1.msra.mxu0 0.0
        %1607 = vmatprep.subr.mxu0 0.0
        %1608 = vmatpush1.msra.mxu0 0.0
        %1609 = vmatprep.subr.mxu0 0.0
        %1610 = vmatpush1.msra.mxu0 0.0
        %1611 = vmatprep.subr.mxu0 0.0
        %1612 = vmatpush1.msra.mxu0 0.0
        %1613 = vmatprep.subr.mxu0 0.0
        %1614 = vmatpush1.msra.mxu0 %v1579
        %1615 = vmatprep.subr.mxu0 0.0
        %1616 = vmatpush2.msra.mxu0 0.0
        %1617 = vmatprep.subr.mxu0 0.0
        %1618 = vmatpush2.msra.mxu0 0.0
        %1619 = vmatprep.subr.mxu0 0.0
        %1620 = vmatpush2.msra.mxu0 0.0
        %1621 = vmatprep.subr.mxu0 0.0
        %1622 = vmatpush2.msra.mxu0 0.0
        %1623 = vmatprep.subr.mxu0 0.0
        %1624 = vmatpush2.msra.mxu0 0.0
        %1625 = vmatprep.subr.mxu0 0.0
        %1626 = vmatpush2.msra.mxu0 0.0
        %1627 = vmatprep.subr.mxu0 0.0
        %1628 = vmatpush2.msra.mxu0 0.0
        %1629 = vmatprep.subr.mxu0 0.0
        %1630 = vmatpush2.msra.mxu0 0.0
        %1631 = vmatprep.subr.mxu0 0.0
        %1632 = vmatpush2.msra.mxu0 0.0
        %1633 = vmatprep.subr.mxu0 0.0
        %1634 = vmatpush2.msra.mxu0 0.0
        %1635 = vmatprep.subr.mxu0 0.0
        %1636 = vmatpush2.msra.mxu0 0.0
        %1637 = vmatprep.subr.mxu0 0.0
        %1638 = vmatpush2.msra.mxu0 0.0
        %1639 = vmatprep.subr.mxu0 0.0
        %1640 = vmatpush2.msra.mxu0 0.0
        %1641 = vmatprep.subr.mxu0 0.0
        %1642 = vmatpush2.msra.mxu0 0.0
        %1643 = vmatprep.subr.mxu0 0.0
        %1644 = vmatpush2.msra.mxu0 0.0
        %1645 = vmatprep.subr.mxu0 0.0
        %1646 = vmatpush2.msra.mxu0 0.0
        %1647 = vmatprep.mubr.f32.mxu0 0.0
        %1648 = vmatmul.mubr.f32.gmra.mxu0 %v1581
        %v1649 = vpop.f32.mrf.mxu0
        %v1650 = vadd.f32 0.0, %v1649
        %v1651 = vpop.f32.mrf.mxu0
        %1652 = vdwg.mxu0
        %v1653 = vadd.f32 %v1189, %v1650
        %s1654 = scalar_lea.vmem %s2, 96
        %v1655 = vld [vmem:[%s1654] sm:$0xff]
        %v1656 = vld [vmem:[%s1654 + $0x8] sm:$0xff]
        %v1657 = vld [vmem:[%s1654 + $0x10] sm:$0xff]
        %v1658 = vld [vmem:[%s1654 + $0x18] sm:$0xff]
        %1659 = vmatprep.subr.mxu0 0.0
        %1660 = vmatpush1.msra.mxu0 0.0
        %1661 = vmatprep.subr.mxu0 0.0
        %1662 = vmatpush1.msra.mxu0 0.0
        %1663 = vmatprep.subr.mxu0 0.0
        %1664 = vmatpush1.msra.mxu0 0.0
        %1665 = vmatprep.subr.mxu0 0.0
        %1666 = vmatpush1.msra.mxu0 0.0
        %1667 = vmatprep.subr.mxu0 0.0
        %1668 = vmatpush1.msra.mxu0 0.0
        %1669 = vmatprep.subr.mxu0 0.0
        %1670 = vmatpush1.msra.mxu0 0.0
        %1671 = vmatprep.subr.mxu0 0.0
        %1672 = vmatpush1.msra.mxu0 0.0
        %1673 = vmatprep.subr.mxu0 0.0
        %1674 = vmatpush1.msra.mxu0 0.0
        %1675 = vmatprep.subr.mxu0 0.0
        %1676 = vmatpush1.msra.mxu0 0.0
        %1677 = vmatprep.subr.mxu0 0.0
        %1678 = vmatpush1.msra.mxu0 0.0
        %1679 = vmatprep.subr.mxu0 0.0
        %1680 = vmatpush1.msra.mxu0 0.0
        %1681 = vmatprep.subr.mxu0 0.0
        %1682 = vmatpush1.msra.mxu0 0.0
        %1683 = vmatprep.subr.mxu0 0.0
        %1684 = vmatpush1.msra.mxu0 %v1658
        %1685 = vmatprep.subr.mxu0 0.0
        %1686 = vmatpush1.msra.mxu0 %v1657
        %1687 = vmatprep.subr.mxu0 0.0
        %1688 = vmatpush1.msra.mxu0 %v1656
        %1689 = vmatprep.subr.mxu0 0.0
        %1690 = vmatpush1.msra.mxu0 %v1655
        %1691 = vmatprep.subr.mxu0 0.0
        %1692 = vmatpush2.msra.mxu0 0.0
        %1693 = vmatprep.subr.mxu0 0.0
        %1694 = vmatpush2.msra.mxu0 0.0
        %1695 = vmatprep.subr.mxu0 0.0
        %1696 = vmatpush2.msra.mxu0 0.0
        %1697 = vmatprep.subr.mxu0 0.0
        %1698 = vmatpush2.msra.mxu0 0.0
        %1699 = vmatprep.subr.mxu0 0.0
        %1700 = vmatpush2.msra.mxu0 0.0
        %1701 = vmatprep.subr.mxu0 0.0
        %1702 = vmatpush2.msra.mxu0 0.0
        %1703 = vmatprep.subr.mxu0 0.0
        %1704 = vmatpush2.msra.mxu0 0.0
        %1705 = vmatprep.subr.mxu0 0.0
        %1706 = vmatpush2.msra.mxu0 0.0
        %1707 = vmatprep.subr.mxu0 0.0
        %1708 = vmatpush2.msra.mxu0 0.0
        %1709 = vmatprep.subr.mxu0 0.0
        %1710 = vmatpush2.msra.mxu0 0.0
        %1711 = vmatprep.subr.mxu0 0.0
        %1712 = vmatpush2.msra.mxu0 0.0
        %1713 = vmatprep.subr.mxu0 0.0
        %1714 = vmatpush2.msra.mxu0 0.0
        %1715 = vmatprep.subr.mxu0 0.0
        %1716 = vmatpush2.msra.mxu0 0.0
        %1717 = vmatprep.subr.mxu0 0.0
        %1718 = vmatpush2.msra.mxu0 0.0
        %1719 = vmatprep.subr.mxu0 0.0
        %1720 = vmatpush2.msra.mxu0 0.0
        %1721 = vmatprep.subr.mxu0 0.0
        %1722 = vmatpush2.msra.mxu0 0.0
        %1723 = vmatprep.mubr.f32.mxu0 0.0
        %1724 = vmatmul.mubr.f32.gmra.mxu0 %v272
        %v1725 = vpop.f32.mrf.mxu0
        %v1726 = vadd.f32 0.0, %v1725
        %v1727 = vpop.f32.mrf.mxu0
        %1728 = vdwg.mxu0
        %s1729 = scalar_lea.vmem %s3, 96
        %v1730 = vld [vmem:[%s1729] sm:$0xff]
        %v1731 = vld [vmem:[%s1729 + $0x8] sm:$0xff]
        %v1732 = vld [vmem:[%s1729 + $0x10] sm:$0xff]
        %v1733 = vld [vmem:[%s1729 + $0x18] sm:$0xff]
        %1734 = vmatprep.subr.mxu0 0.0
        %1735 = vmatpush1.msra.mxu0 0.0
        %1736 = vmatprep.subr.mxu0 0.0
        %1737 = vmatpush1.msra.mxu0 0.0
        %1738 = vmatprep.subr.mxu0 0.0
        %1739 = vmatpush1.msra.mxu0 0.0
        %1740 = vmatprep.subr.mxu0 0.0
        %1741 = vmatpush1.msra.mxu0 0.0
        %1742 = vmatprep.subr.mxu0 0.0
        %1743 = vmatpush1.msra.mxu0 0.0
        %1744 = vmatprep.subr.mxu0 0.0
        %1745 = vmatpush1.msra.mxu0 0.0
        %1746 = vmatprep.subr.mxu0 0.0
        %1747 = vmatpush1.msra.mxu0 0.0
        %1748 = vmatprep.subr.mxu0 0.0
        %1749 = vmatpush1.msra.mxu0 0.0
        %1750 = vmatprep.subr.mxu0 0.0
        %1751 = vmatpush1.msra.mxu0 0.0
        %1752 = vmatprep.subr.mxu0 0.0
        %1753 = vmatpush1.msra.mxu0 0.0
        %1754 = vmatprep.subr.mxu0 0.0
        %1755 = vmatpush1.msra.mxu0 0.0
        %1756 = vmatprep.subr.mxu0 0.0
        %1757 = vmatpush1.msra.mxu0 0.0
        %1758 = vmatprep.subr.mxu0 0.0
        %1759 = vmatpush1.msra.mxu0 %v1733
        %1760 = vmatprep.subr.mxu0 0.0
        %1761 = vmatpush1.msra.mxu0 %v1732
        %1762 = vmatprep.subr.mxu0 0.0
        %1763 = vmatpush1.msra.mxu0 %v1731
        %1764 = vmatprep.subr.mxu0 0.0
        %1765 = vmatpush1.msra.mxu0 %v1730
        %1766 = vmatprep.subr.mxu0 0.0
        %1767 = vmatpush2.msra.mxu0 0.0
        %1768 = vmatprep.subr.mxu0 0.0
        %1769 = vmatpush2.msra.mxu0 0.0
        %1770 = vmatprep.subr.mxu0 0.0
        %1771 = vmatpush2.msra.mxu0 0.0
        %1772 = vmatprep.subr.mxu0 0.0
        %1773 = vmatpush2.msra.mxu0 0.0
        %1774 = vmatprep.subr.mxu0 0.0
        %1775 = vmatpush2.msra.mxu0 0.0
        %1776 = vmatprep.subr.mxu0 0.0
        %1777 = vmatpush2.msra.mxu0 0.0
        %1778 = vmatprep.subr.mxu0 0.0
        %1779 = vmatpush2.msra.mxu0 0.0
        %1780 = vmatprep.subr.mxu0 0.0
        %1781 = vmatpush2.msra.mxu0 0.0
        %1782 = vmatprep.subr.mxu0 0.0
        %1783 = vmatpush2.msra.mxu0 0.0
        %1784 = vmatprep.subr.mxu0 0.0
        %1785 = vmatpush2.msra.mxu0 0.0
        %1786 = vmatprep.subr.mxu0 0.0
        %1787 = vmatpush2.msra.mxu0 0.0
        %1788 = vmatprep.subr.mxu0 0.0
        %1789 = vmatpush2.msra.mxu0 0.0
        %1790 = vmatprep.subr.mxu0 0.0
        %1791 = vmatpush2.msra.mxu0 0.0
        %1792 = vmatprep.subr.mxu0 0.0
        %1793 = vmatpush2.msra.mxu0 0.0
        %1794 = vmatprep.subr.mxu0 0.0
        %1795 = vmatpush2.msra.mxu0 0.0
        %1796 = vmatprep.subr.mxu0 0.0
        %1797 = vmatpush2.msra.mxu0 0.0
        %1798 = vmatprep.mubr.f32.mxu0 0.0
        %1799 = vmatmul.mubr.f32.gmra.mxu0 %v349
        %v1800 = vpop.f32.mrf.mxu0
        %v1801 = vadd.f32 0.0, %v1800
        %v1802 = vpop.f32.mrf.mxu0
        %1803 = vdwg.mxu0
        %s1804 = scalar_lea.vmem %s4, 96
        %v1805 = vld [vmem:[%s1804] sm:$0xff]
        %v1806 = vld [vmem:[%s1804 + $0x8] sm:$0xff]
        %v1807 = vld [vmem:[%s1804 + $0x10] sm:$0xff]
        %v1808 = vld [vmem:[%s1804 + $0x18] sm:$0xff]
        %1809 = vmatprep.subr.mxu0 0.0
        %1810 = vmatpush1.msra.mxu0 0.0
        %1811 = vmatprep.subr.mxu0 0.0
        %1812 = vmatpush1.msra.mxu0 0.0
        %1813 = vmatprep.subr.mxu0 0.0
        %1814 = vmatpush1.msra.mxu0 0.0
        %1815 = vmatprep.subr.mxu0 0.0
        %1816 = vmatpush1.msra.mxu0 0.0
        %1817 = vmatprep.subr.mxu0 0.0
        %1818 = vmatpush1.msra.mxu0 0.0
        %1819 = vmatprep.subr.mxu0 0.0
        %1820 = vmatpush1.msra.mxu0 0.0
        %1821 = vmatprep.subr.mxu0 0.0
        %1822 = vmatpush1.msra.mxu0 0.0
        %1823 = vmatprep.subr.mxu0 0.0
        %1824 = vmatpush1.msra.mxu0 0.0
        %1825 = vmatprep.subr.mxu0 0.0
        %1826 = vmatpush1.msra.mxu0 0.0
        %1827 = vmatprep.subr.mxu0 0.0
        %1828 = vmatpush1.msra.mxu0 0.0
        %1829 = vmatprep.subr.mxu0 0.0
        %1830 = vmatpush1.msra.mxu0 0.0
        %1831 = vmatprep.subr.mxu0 0.0
        %1832 = vmatpush1.msra.mxu0 0.0
        %1833 = vmatprep.subr.mxu0 0.0
        %1834 = vmatpush1.msra.mxu0 %v1808
        %1835 = vmatprep.subr.mxu0 0.0
        %1836 = vmatpush1.msra.mxu0 %v1807
        %1837 = vmatprep.subr.mxu0 0.0
        %1838 = vmatpush1.msra.mxu0 %v1806
        %1839 = vmatprep.subr.mxu0 0.0
        %1840 = vmatpush1.msra.mxu0 %v1805
        %1841 = vmatprep.subr.mxu0 0.0
        %1842 = vmatpush2.msra.mxu0 0.0
        %1843 = vmatprep.subr.mxu0 0.0
        %1844 = vmatpush2.msra.mxu0 0.0
        %1845 = vmatprep.subr.mxu0 0.0
        %1846 = vmatpush2.msra.mxu0 0.0
        %1847 = vmatprep.subr.mxu0 0.0
        %1848 = vmatpush2.msra.mxu0 0.0
        %1849 = vmatprep.subr.mxu0 0.0
        %1850 = vmatpush2.msra.mxu0 0.0
        %1851 = vmatprep.subr.mxu0 0.0
        %1852 = vmatpush2.msra.mxu0 0.0
        %1853 = vmatprep.subr.mxu0 0.0
        %1854 = vmatpush2.msra.mxu0 0.0
        %1855 = vmatprep.subr.mxu0 0.0
        %1856 = vmatpush2.msra.mxu0 0.0
        %1857 = vmatprep.subr.mxu0 0.0
        %1858 = vmatpush2.msra.mxu0 0.0
        %1859 = vmatprep.subr.mxu0 0.0
        %1860 = vmatpush2.msra.mxu0 0.0
        %1861 = vmatprep.subr.mxu0 0.0
        %1862 = vmatpush2.msra.mxu0 0.0
        %1863 = vmatprep.subr.mxu0 0.0
        %1864 = vmatpush2.msra.mxu0 0.0
        %1865 = vmatprep.subr.mxu0 0.0
        %1866 = vmatpush2.msra.mxu0 0.0
        %1867 = vmatprep.subr.mxu0 0.0
        %1868 = vmatpush2.msra.mxu0 0.0
        %1869 = vmatprep.subr.mxu0 0.0
        %1870 = vmatpush2.msra.mxu0 0.0
        %1871 = vmatprep.subr.mxu0 0.0
        %1872 = vmatpush2.msra.mxu0 0.0
        %1873 = vmatprep.mubr.f32.mxu0 0.0
        %1874 = vmatmul.mubr.f32.gmra.mxu0 %v349
        %v1875 = vpop.f32.mrf.mxu0
        %v1876 = vadd.f32 0.0, %v1875
        %v1877 = vpop.f32.mrf.mxu0
        %1878 = vdwg.mxu0
        %v1880 = vsel %vm495, %v1726, 0
        %v1883 = vsel %vm495, %v1801, 0
        %1885 = vmatprep.subr.mxu0 0.0
        %1886 = vmatpush1.xpose.msra.mxu0 0.0
        %1887 = vmatprep.subr.mxu0 0.0
        %1888 = vmatpush1.xpose.msra.mxu0 0.0
        %1889 = vmatprep.subr.mxu0 0.0
        %1890 = vmatpush1.xpose.msra.mxu0 0.0
        %1891 = vmatprep.subr.mxu0 0.0
        %1892 = vmatpush1.xpose.msra.mxu0 0.0
        %1893 = vmatprep.subr.mxu0 0.0
        %1894 = vmatpush1.xpose.msra.mxu0 0.0
        %1895 = vmatprep.subr.mxu0 0.0
        %1896 = vmatpush1.xpose.msra.mxu0 0.0
        %1897 = vmatprep.subr.mxu0 0.0
        %1898 = vmatpush1.xpose.msra.mxu0 0.0
        %1899 = vmatprep.subr.mxu0 0.0
        %1900 = vmatpush1.xpose.msra.mxu0 0.0
        %1901 = vmatprep.subr.mxu0 0.0
        %1902 = vmatpush1.xpose.msra.mxu0 0.0
        %1903 = vmatprep.subr.mxu0 0.0
        %1904 = vmatpush1.xpose.msra.mxu0 0.0
        %1905 = vmatprep.subr.mxu0 0.0
        %1906 = vmatpush1.xpose.msra.mxu0 0.0
        %1907 = vmatprep.subr.mxu0 0.0
        %1908 = vmatpush1.xpose.msra.mxu0 0.0
        %1909 = vmatprep.subr.mxu0 0.0
        %1910 = vmatpush1.xpose.msra.mxu0 0.0
        %1911 = vmatprep.subr.mxu0 0.0
        %1912 = vmatpush1.xpose.msra.mxu0 0.0
        %1913 = vmatprep.subr.mxu0 0.0
        %1914 = vmatpush1.xpose.msra.mxu0 0.0
        %1915 = vmatprep.subr.mxu0 0.0
        %1916 = vmatpush1.xpose.msra.mxu0 %v1883
        %1917 = vmatprep.subr.mxu0 0.0
        %1918 = vmatpush2.xpose.msra.mxu0 0.0
        %1919 = vmatprep.subr.mxu0 0.0
        %1920 = vmatpush2.xpose.msra.mxu0 0.0
        %1921 = vmatprep.subr.mxu0 0.0
        %1922 = vmatpush2.xpose.msra.mxu0 0.0
        %1923 = vmatprep.subr.mxu0 0.0
        %1924 = vmatpush2.xpose.msra.mxu0 0.0
        %1925 = vmatprep.subr.mxu0 0.0
        %1926 = vmatpush2.xpose.msra.mxu0 0.0
        %1927 = vmatprep.subr.mxu0 0.0
        %1928 = vmatpush2.xpose.msra.mxu0 0.0
        %1929 = vmatprep.subr.mxu0 0.0
        %1930 = vmatpush2.xpose.msra.mxu0 0.0
        %1931 = vmatprep.subr.mxu0 0.0
        %1932 = vmatpush2.xpose.msra.mxu0 0.0
        %1933 = vmatprep.subr.mxu0 0.0
        %1934 = vmatpush2.xpose.msra.mxu0 0.0
        %1935 = vmatprep.subr.mxu0 0.0
        %1936 = vmatpush2.xpose.msra.mxu0 0.0
        %1937 = vmatprep.subr.mxu0 0.0
        %1938 = vmatpush2.xpose.msra.mxu0 0.0
        %1939 = vmatprep.subr.mxu0 0.0
        %1940 = vmatpush2.xpose.msra.mxu0 0.0
        %1941 = vmatprep.subr.mxu0 0.0
        %1942 = vmatpush2.xpose.msra.mxu0 0.0
        %1943 = vmatprep.subr.mxu0 0.0
        %1944 = vmatpush2.xpose.msra.mxu0 0.0
        %1945 = vmatprep.subr.mxu0 0.0
        %1946 = vmatpush2.xpose.msra.mxu0 0.0
        %1947 = vmatprep.subr.mxu0 0.0
        %1948 = vmatpush2.xpose.msra.mxu0 0.0
        %1949 = vmatprep.mubr.f32.mxu0 0.0
        %1950 = vmatmul.mubr.f32.gmra.mxu0 %v1880
        %v1951 = vpop.f32.mrf.mxu0
        %v1952 = vadd.f32 0.0, %v1951
        %v1953 = vpop.f32.mrf.mxu0
        %1954 = vdwg.mxu0
        %v1955 = vmul.f32 %v1952, 0.35355338
        %v1956 = vsel %vm495, %v1955, -inf
        %1957 = vmax.xlane.f32.xlu0 %v1956
        %v1958 = vpop.xlane.xlu0 %1957
        %v1959 = vsub.f32 %v1955, %v1958
        %v1960 = vmul.f32 %v1959, 1.442695
        %v1961 = vpow.pop %v1960
        %v1962 = vsel %vm495, %v1961, 0.0
        %1963 = vadd.xlane.f32.xlu0 %v1962
        %v1964 = vpop.xlane.xlu0 %1963
        %v1965 = vrcp.pop %v1964
        %v1966 = vmul.f32 %v1961, %v1965
        %v1968 = vsel %vm495, %v1966, 0
        %1970 = vmatprep.subr.mxu0 0.0
        %1971 = vmatpush1.msra.mxu0 0.0
        %1972 = vmatprep.subr.mxu0 0.0
        %1973 = vmatpush1.msra.mxu0 0.0
        %1974 = vmatprep.subr.mxu0 0.0
        %1975 = vmatpush1.msra.mxu0 0.0
        %1976 = vmatprep.subr.mxu0 0.0
        %1977 = vmatpush1.msra.mxu0 0.0
        %1978 = vmatprep.subr.mxu0 0.0
        %1979 = vmatpush1.msra.mxu0 0.0
        %1980 = vmatprep.subr.mxu0 0.0
        %1981 = vmatpush1.msra.mxu0 0.0
        %1982 = vmatprep.subr.mxu0 0.0
        %1983 = vmatpush1.msra.mxu0 0.0
        %1984 = vmatprep.subr.mxu0 0.0
        %1985 = vmatpush1.msra.mxu0 0.0
        %1986 = vmatprep.subr.mxu0 0.0
        %1987 = vmatpush1.msra.mxu0 0.0
        %1988 = vmatprep.subr.mxu0 0.0
        %1989 = vmatpush1.msra.mxu0 0.0
        %1990 = vmatprep.subr.mxu0 0.0
        %1991 = vmatpush1.msra.mxu0 0.0
        %1992 = vmatprep.subr.mxu0 0.0
        %1993 = vmatpush1.msra.mxu0 0.0
        %1994 = vmatprep.subr.mxu0 0.0
        %1995 = vmatpush1.msra.mxu0 0.0
        %1996 = vmatprep.subr.mxu0 0.0
        %1997 = vmatpush1.msra.mxu0 0.0
        %1998 = vmatprep.subr.mxu0 0.0
        %1999 = vmatpush1.msra.mxu0 0.0
        %2000 = vmatprep.subr.mxu0 0.0
        %2001 = vmatpush1.msra.mxu0 %v1876
        %2002 = vmatprep.subr.mxu0 0.0
        %2003 = vmatpush2.msra.mxu0 0.0
        %2004 = vmatprep.subr.mxu0 0.0
        %2005 = vmatpush2.msra.mxu0 0.0
        %2006 = vmatprep.subr.mxu0 0.0
        %2007 = vmatpush2.msra.mxu0 0.0
        %2008 = vmatprep.subr.mxu0 0.0
        %2009 = vmatpush2.msra.mxu0 0.0
        %2010 = vmatprep.subr.mxu0 0.0
        %2011 = vmatpush2.msra.mxu0 0.0
        %2012 = vmatprep.subr.mxu0 0.0
        %2013 = vmatpush2.msra.mxu0 0.0
        %2014 = vmatprep.subr.mxu0 0.0
        %2015 = vmatpush2.msra.mxu0 0.0
        %2016 = vmatprep.subr.mxu0 0.0
        %2017 = vmatpush2.msra.mxu0 0.0
        %2018 = vmatprep.subr.mxu0 0.0
        %2019 = vmatpush2.msra.mxu0 0.0
        %2020 = vmatprep.subr.mxu0 0.0
        %2021 = vmatpush2.msra.mxu0 0.0
        %2022 = vmatprep.subr.mxu0 0.0
        %2023 = vmatpush2.msra.mxu0 0.0
        %2024 = vmatprep.subr.mxu0 0.0
        %2025 = vmatpush2.msra.mxu0 0.0
        %2026 = vmatprep.subr.mxu0 0.0
        %2027 = vmatpush2.msra.mxu0 0.0
        %2028 = vmatprep.subr.mxu0 0.0
        %2029 = vmatpush2.msra.mxu0 0.0
        %2030 = vmatprep.subr.mxu0 0.0
        %2031 = vmatpush2.msra.mxu0 0.0
        %2032 = vmatprep.subr.mxu0 0.0
        %2033 = vmatpush2.msra.mxu0 0.0
        %2034 = vmatprep.mubr.f32.mxu0 0.0
        %2035 = vmatmul.mubr.f32.gmra.mxu0 %v1968
        %v2036 = vpop.f32.mrf.mxu0
        %v2037 = vadd.f32 0.0, %v2036
        %v2038 = vpop.f32.mrf.mxu0
        %2039 = vdwg.mxu0
        %s2040 = scalar_lea.vmem %s5, 24
        %v2041 = vld [vmem:[%s2040] sm:$0xff]
        %v2043 = vsel %vm495, %v2037, 0
        %2045 = vmatprep.subr.mxu0 0.0
        %2046 = vmatpush1.msra.mxu0 0.0
        %2047 = vmatprep.subr.mxu0 0.0
        %2048 = vmatpush1.msra.mxu0 0.0
        %2049 = vmatprep.subr.mxu0 0.0
        %2050 = vmatpush1.msra.mxu0 0.0
        %2051 = vmatprep.subr.mxu0 0.0
        %2052 = vmatpush1.msra.mxu0 0.0
        %2053 = vmatprep.subr.mxu0 0.0
        %2054 = vmatpush1.msra.mxu0 0.0
        %2055 = vmatprep.subr.mxu0 0.0
        %2056 = vmatpush1.msra.mxu0 0.0
        %2057 = vmatprep.subr.mxu0 0.0
        %2058 = vmatpush1.msra.mxu0 0.0
        %2059 = vmatprep.subr.mxu0 0.0
        %2060 = vmatpush1.msra.mxu0 0.0
        %2061 = vmatprep.subr.mxu0 0.0
        %2062 = vmatpush1.msra.mxu0 0.0
        %2063 = vmatprep.subr.mxu0 0.0
        %2064 = vmatpush1.msra.mxu0 0.0
        %2065 = vmatprep.subr.mxu0 0.0
        %2066 = vmatpush1.msra.mxu0 0.0
        %2067 = vmatprep.subr.mxu0 0.0
        %2068 = vmatpush1.msra.mxu0 0.0
        %2069 = vmatprep.subr.mxu0 0.0
        %2070 = vmatpush1.msra.mxu0 0.0
        %2071 = vmatprep.subr.mxu0 0.0
        %2072 = vmatpush1.msra.mxu0 0.0
        %2073 = vmatprep.subr.mxu0 0.0
        %2074 = vmatpush1.msra.mxu0 0.0
        %2075 = vmatprep.subr.mxu0 0.0
        %2076 = vmatpush1.msra.mxu0 %v2041
        %2077 = vmatprep.subr.mxu0 0.0
        %2078 = vmatpush2.msra.mxu0 0.0
        %2079 = vmatprep.subr.mxu0 0.0
        %2080 = vmatpush2.msra.mxu0 0.0
        %2081 = vmatprep.subr.mxu0 0.0
        %2082 = vmatpush2.msra.mxu0 0.0
        %2083 = vmatprep.subr.mxu0 0.0
        %2084 = vmatpush2.msra.mxu0 0.0
        %2085 = vmatprep.subr.mxu0 0.0
        %2086 = vmatpush2.msra.mxu0 0.0
        %2087 = vmatprep.subr.mxu0 0.0
        %2088 = vmatpush2.msra.mxu0 0.0
        %2089 = vmatprep.subr.mxu0 0.0
        %2090 = vmatpush2.msra.mxu0 0.0
        %2091 = vmatprep.subr.mxu0 0.0
        %2092 = vmatpush2.msra.mxu0 0.0
        %2093 = vmatprep.subr.mxu0 0.0
        %2094 = vmatpush2.msra.mxu0 0.0
        %2095 = vmatprep.subr.mxu0 0.0
        %2096 = vmatpush2.msra.mxu0 0.0
        %2097 = vmatprep.subr.mxu0 0.0
        %2098 = vmatpush2.msra.mxu0 0.0
        %2099 = vmatprep.subr.mxu0 0.0
        %2100 = vmatpush2.msra.mxu0 0.0
        %2101 = vmatprep.subr.mxu0 0.0
        %2102 = vmatpush2.msra.mxu0 0.0
        %2103 = vmatprep.subr.mxu0 0.0
        %2104 = vmatpush2.msra.mxu0 0.0
        %2105 = vmatprep.subr.mxu0 0.0
        %2106 = vmatpush2.msra.mxu0 0.0
        %2107 = vmatprep.subr.mxu0 0.0
        %2108 = vmatpush2.msra.mxu0 0.0
        %2109 = vmatprep.mubr.f32.mxu0 0.0
        %2110 = vmatmul.mubr.f32.gmra.mxu0 %v2043
        %v2111 = vpop.f32.mrf.mxu0
        %v2112 = vadd.f32 0.0, %v2111
        %v2113 = vpop.f32.mrf.mxu0
        %2114 = vdwg.mxu0
        %v2115 = vadd.f32 %v1653, %v2112
        %v2116 = vadd.f32 %v2115, %v264
        %v2117 = vsel %vm270, %v2116, 0.0
        %2118 = vadd.xlane.f32.xlu0 %v2117
        %v2119 = vpop.xlane.xlu0 %2118
        %v2120 = vrcp.pop 32.0
        %v2121 = vmul.f32 %v2119, %v2120
        %v2122 = vsub.f32 %v2116, %v2121
        %v2123 = vmul.f32 %v2122, %v2122
        %v2124 = vsel %vm270, %v2123, 0.0
        %2125 = vadd.xlane.f32.xlu0 %v2124
        %v2126 = vpop.xlane.xlu0 %2125
        %v2127 = vmul.f32 %v2126, %v2120
        %v2128 = vadd.f32 %v2127, 1e-05
        %v2129 = vrsqrt.pop %v2128
        %v2130 = vmul.f32 %v2122, %v2129
        %2131 = vst.msk [vmem:[%s255] sm:$0xff] %vm270, %v2130
        %s2132 = sand.u32 %s164, 1
        %s2133 = scalar_lea.sflag [#allocation3], %s2132
        %s2134 = sand.u32 %s164, 1
        %s2135 = smul.addr %s2134, 8
        %s2136 = scalar_lea.vmem [#allocation2], %s2135
        // Predicated region
        $region45: #{tpu_custom_call.1} parent=43 // pred_check
          %p2137 = pneg %p174
        $region46: #{tpu_custom_call.1} parent=43 // pred_check_branch
          %2139 = sbr.rel (%p2137) target = $region48
        $region47: #{tpu_custom_call.1} parent=43 // pred_region
          %s2141 = ssub.s32 128, 128
          %2142 = vsyncadd %s2133, %s2141
          %s2143 = smul.addr %s20, 128
          %s2144 = scalar_lea.hbm %s6, %s2143
          %s2146 = sshll.u32 %s2136, 4
          %s2147 = int_to_ptr.vmem [resolvable:$true] %s2146
          %2149 = dma.vmem_to_hbm [thread:$0]  %s2147, 128, %s2144, %s2133
        $region48: #{tpu_custom_call.1} parent=43 // pred_fallthru
          _
      $region44: #{tpu_custom_call.1} parent=5 // pred_fallthru
        _
      %p2150 = scmp.le.s32.totalorder 2, %s15
      // Predicated region
      $region49: #{tpu_custom_call.1} parent=5 // pred_check
        %p2151 = pneg %p2150
      $region50: #{tpu_custom_call.1} parent=5 // pred_check_branch
        %2153 = sbr.rel (%p2151) target = $region52
      $region51: #{tpu_custom_call.1} parent=5 // pred_region
        %s2154 = ssub.s32 %s15, 2
        // Predicated region
        $region53: #{tpu_custom_call.1} parent=51 // pred_check
          %p2155 = pneg %p180
        $region54: #{tpu_custom_call.1} parent=51 // pred_check_branch
          %2157 = sbr.rel (%p2155) target = $region56
        $region55: #{tpu_custom_call.1} parent=51 // pred_region
          %s2158 = sand.u32 %s165, 1
          %s2159 = scalar_lea.sflag [#allocation3], %s2158
          %s2160 = sand.u32 %s165, 1
          %s2161 = smul.addr %s2160, 8
          %s2162 = scalar_lea.vmem [#allocation2], %s2161
          %2163 = dma.done %s2159, 128
        $region56: #{tpu_custom_call.1} parent=51 // pred_fallthru
          _
      $region52: #{tpu_custom_call.1} parent=5 // pred_fallthru
        _
    $region6: #{tpu_custom_call.1} parent=1 // loop_footer
      %s19 = sadd.s32 1, %s15
    $region7: #{tpu_custom_call.1} parent=1 // loop_footer_branch
      %14 = sbr.rel target = $region3
    $region8: #{tpu_custom_call.1} parent=1 // loop_exit
      _
    %2164 = vsyncpa [#allocation3], 1
    %s2165 = scalar_lea.sflag [#allocation3], 1
    %2166 = vsyncpa %s2165, 1

</llo_original>
